<compile_context>
chip_gen: v7x
topology: tpu7x:2x2x1
jax: 0.10.0
libtpu: 0.0.40
codegen_flags: <defaults>
</compile_context>

<pallas_src>
import numpy as np
import jax
import jax.numpy as jnp
from jax import lax
from jax.experimental import pallas as pl
from jax.experimental.pallas import tpu as pltpu

EPS = 1e-5


def fold_bn(gamma, beta, mean, var):
    scale = gamma / jnp.sqrt(var + EPS)
    return scale, beta - mean * scale


def build_wmask(H, W):
    """wmask[j, p] = 1 iff column (p % W) + (j - 1) stays inside the image."""
    HW = H * W
    m = np.zeros((3, HW), np.float32)
    w = np.arange(HW) % W
    for j, ow in enumerate((-1, 0, 1)):
        m[j] = ((w + ow >= 0) & (w + ow < W)).astype(np.float32)
    return jnp.asarray(m)


def build_downsample(H, W, Ho, Wo, stride):
    """One-hot (H*W, Ho*Wo) matrix picking the strided output pixels."""
    S = np.zeros((H * W, Ho * Wo), np.float32)
    for ho in range(Ho):
        for wo in range(Wo):
            S[(stride * ho) * W + stride * wo, ho * Wo + wo] = 1.0
    return jnp.asarray(S)


def init_params(key, cin, cout, t):
    """Deterministic synthetic parameters (PyTorch layouts: conv OIHW)."""
    cmid = cin * t
    ks = jax.random.split(key, 15)

    def bn(k0, k1, k2, k3, c):
        return (jax.random.uniform(k0, (c,), jnp.float32, 0.5, 1.5),   # gamma
                jax.random.normal(k1, (c,), jnp.float32) * 0.1,         # beta
                jax.random.normal(k2, (c,), jnp.float32) * 0.1,         # running_mean
                jax.random.uniform(k3, (c,), jnp.float32, 0.5, 1.5))    # running_var

    p = {}
    p["conv1_w"] = jax.random.normal(ks[0], (cmid, cin, 1, 1), jnp.float32) * 0.2
    (p["bn1_gamma"], p["bn1_beta"], p["bn1_mean"], p["bn1_var"]) = bn(ks[1], ks[2], ks[3], ks[4], cmid)
    p["dw_w"] = jax.random.normal(ks[5], (cmid, 1, 3, 3), jnp.float32) * 0.2
    (p["bn2_gamma"], p["bn2_beta"], p["bn2_mean"], p["bn2_var"]) = bn(ks[6], ks[7], ks[8], ks[9], cmid)
    p["conv3_w"] = jax.random.normal(ks[10], (cout, cmid, 1, 1), jnp.float32) * 0.2
    (p["bn3_gamma"], p["bn3_beta"], p["bn3_mean"], p["bn3_var"]) = bn(ks[11], ks[12], ks[13], ks[14], cout)
    return p


def linear_bottleneck_forward(x_nchw, params, *, t, stride):
    N, Cin, H, W = x_nchw.shape
    Cmid = Cin * t
    Cout = params["conv3_w"].shape[0]
    Ho = (H + 2 - 3) // stride + 1
    Wo = (W + 2 - 3) // stride + 1
    HW, HoWo = H * W, Ho * Wo
    use_shortcut = (stride == 1 and Cin == Cout)
    with_sel = stride != 1

    # ---- glue: layout + one-time parameter folding (plain JAX / numpy) ----
    x_flat = x_nchw.reshape(N, Cin, HW)                           # NCHW -> (N, C, H*W), no transpose

    s1, b1 = fold_bn(params["bn1_gamma"], params["bn1_beta"], params["bn1_mean"], params["bn1_var"])
    s2, b2 = fold_bn(params["bn2_gamma"], params["bn2_beta"], params["bn2_mean"], params["bn2_var"])
    s3, b3 = fold_bn(params["bn3_gamma"], params["bn3_beta"], params["bn3_mean"], params["bn3_var"])

    w1 = (params["conv1_w"][:, :, 0, 0] * s1[:, None]).astype(jnp.bfloat16)   # (Cmid, Cin)  BN1 folded
    w3 = (params["conv3_w"][:, :, 0, 0] * s3[:, None]).astype(jnp.bfloat16)   # (Cout, Cmid) BN3 folded
    kdw = (params["dw_w"][:, 0, :, :].reshape(Cmid, 9) * s2[:, None]).astype(jnp.float32)  # BN2 folded
    b1c = b1.reshape(Cmid, 1).astype(jnp.float32)
    b2c = b2.reshape(Cmid, 1).astype(jnp.float32)
    b3c = b3.reshape(Cout, 1).astype(jnp.float32)

    wmask = build_wmask(H, W)                                     # (3, HW) f32
    sel = build_downsample(H, W, Ho, Wo, stride) if with_sel else None

    # ---- fused kernel: (Cin,HW) -> (Cmid,HW) -> (Cmid,HoWo) -> (Cout,HoWo) ----
    def kernel(*refs):
        if with_sel:
            (x_ref, w1_ref, b1_ref, kdw_ref, wmask_ref, b2_ref,
             sel_ref, w3_ref, b3_ref, o_ref) = refs
        else:
            (x_ref, w1_ref, b1_ref, kdw_ref, wmask_ref, b2_ref,
             w3_ref, b3_ref, o_ref) = refs

        x = x_ref[0]                                              # (Cin, HW) f32

        # stage 1: 1x1 conv (BN scale pre-folded) + bias + ReLU      [MXU bf16]
        y = jnp.dot(w1_ref[...], x.astype(jnp.bfloat16),
                    preferred_element_type=jnp.float32)           # (Cmid, HW) f32
        y = jnp.maximum(y + b1_ref[...], 0.0)

        # stage 2: depthwise 3x3 as 9 lane-shifted taps              [VPU/XLU]
        wm_l = wmask_ref[0:1, :]                                  # valid when reading column w-1
        wm_r = wmask_ref[2:3, :]                                  # valid when reading column w+1
        zpad = jnp.zeros((Cmid, W + 1), jnp.float32)
        ypad = jnp.concatenate([zpad, y, zpad], axis=1)           # (Cmid, HW + 2W + 2)
        acc = jnp.zeros((Cmid, HW), jnp.float32)
        for dh in range(3):
            for dw in range(3):
                tap = 3 * dh + dw
                off = (dh - 1) * W + (dw - 1)
                shifted = ypad[:, (W + 1) + off:(W + 1) + off + HW]   # out[:,p] = y[:,p+off], 0 OOB
                if dw == 0:
                    shifted = shifted * wm_l
                elif dw == 2:
                    shifted = shifted * wm_r
                acc = acc + kdw_ref[:, tap:tap + 1] * shifted     # (Cmid,1)*(Cmid,HW) FMA

        if with_sel:   # stride > 1: select strided output pixels via one-hot GEMM
            acc = jnp.dot(acc, sel_ref[...], preferred_element_type=jnp.float32)
        z = jnp.maximum(acc + b2_ref[...], 0.0)                   # (Cmid, HoWo)

        # stage 3: 1x1 conv (BN scale pre-folded) + bias (+ residual)  [MXU bf16]
        o = jnp.dot(w3_ref[...], z.astype(jnp.bfloat16),
                    preferred_element_type=jnp.float32)           # (Cout, HoWo)
        o = o + b3_ref[...]
        if use_shortcut:                                          # static
            o = o + x                                             # f32 residual path
        o_ref[0] = o.astype(o_ref.dtype)

    def call(single_buffer):
        def inv(shape):
            idx = lambda n: (0,) * len(shape)
            if single_buffer:
                return pl.BlockSpec(shape, idx, pipeline_mode=pl.Buffered(1))
            return pl.BlockSpec(shape, idx)

        in_specs = [pl.BlockSpec((1, Cin, HW), lambda n: (n, 0, 0)),
                    inv((Cmid, Cin)), inv((Cmid, 1)), inv((Cmid, 9)),
                    inv((3, HW)), inv((Cmid, 1))]
        args = [x_flat, w1, b1c, kdw, wmask, b2c]
        if with_sel:
            in_specs.append(inv((HW, HoWo)))
            args.append(sel)
        in_specs += [inv((Cout, Cmid)), inv((Cout, 1))]
        args += [w3, b3c]

        return pl.pallas_call(
            kernel,
            out_shape=jax.ShapeDtypeStruct((N, Cout, HoWo), jnp.float32),
            grid=(N,),   # one image per step; "parallel" lets v7x's 2 TCs split the batch
            in_specs=in_specs,
            out_specs=pl.BlockSpec((1, Cout, HoWo), lambda n: (n, 0, 0)),
            compiler_params=pltpu.CompilerParams(dimension_semantics=("parallel",)),
        )(*args)

    single = hasattr(pl, "Buffered")
    try:
        out_flat = call(single)
    except Exception:
        if not single:
            raise
        out_flat = call(False)    # fall back to default buffering for the constants

    return out_flat.reshape(N, Cout, Ho, Wo)                      # already NCHW


def reference_forward(x, p, stride):
    """Independent NCHW reference using lax.conv (mirrors PyTorch eval-mode)."""
    dn = ("NCHW", "OIHW", "NCHW")

    def bn(v, pref):
        g = p[pref + "_gamma"][None, :, None, None]
        b = p[pref + "_beta"][None, :, None, None]
        m = p[pref + "_mean"][None, :, None, None]
        var = p[pref + "_var"][None, :, None, None]
        return (v - m) / jnp.sqrt(var + EPS) * g + b

    Cin, Cout = x.shape[1], p["conv3_w"].shape[0]
    use_shortcut = (stride == 1 and Cin == Cout)
    y = lax.conv_general_dilated(x, p["conv1_w"], (1, 1), "VALID", dimension_numbers=dn)
    y = jax.nn.relu(bn(y, "bn1"))
    Cmid = y.shape[1]
    z = lax.conv_general_dilated(y, p["dw_w"], (stride, stride), ((1, 1), (1, 1)),
                                 dimension_numbers=dn, feature_group_count=Cmid)
    z = jax.nn.relu(bn(z, "bn2"))
    o = lax.conv_general_dilated(z, p["conv3_w"], (1, 1), "VALID", dimension_numbers=dn)
    o = bn(o, "bn3")
    if use_shortcut:
        o = o + x
    return o


if __name__ == "__main__":
    key = jax.random.PRNGKey(0)
    kx, kp_a, kp_b = jax.random.split(key, 3)
    x = jax.random.normal(kx, (2, 4, 16, 16), jnp.float32)        # NCHW

    # Config A: defaults (in=4, out=8, t=6, stride=2) -> no shortcut.
    params_a = init_params(kp_a, 4, 8, 6)
    out_a = jax.block_until_ready(linear_bottleneck_forward(x, params_a, t=6, stride=2))
    ref_a = jax.block_until_ready(reference_forward(x, params_a, 2))
    assert out_a.shape == (2, 8, 8, 8)
    np.testing.assert_allclose(np.asarray(out_a), np.asarray(ref_a), rtol=5e-2, atol=5e-2)

    # Config B: stride=1, in==out -> residual shortcut path.
    params_b = init_params(kp_b, 4, 4, 6)
    out_b = jax.block_until_ready(linear_bottleneck_forward(x, params_b, t=6, stride=1))
    ref_b = jax.block_until_ready(reference_forward(x, params_b, 1))
    assert out_b.shape == (2, 4, 16, 16)
    np.testing.assert_allclose(np.asarray(out_b), np.asarray(ref_b), rtol=5e-2, atol=5e-2)

    print("KERNEL_OK")
</pallas_src>

<mosaic_0001>
module attributes {stable_mosaic.version = 11 : i64} {
  func.func @kernel(%arg0: i32, %arg1: memref<1x4x256xf32, #tpu.memory_space<vmem>>, %arg2: memref<24x4xbf16, #tpu.memory_space<vmem>>, %arg3: memref<24x1xf32, #tpu.memory_space<vmem>>, %arg4: memref<24x9xf32, #tpu.memory_space<vmem>>, %arg5: memref<3x256xf32, #tpu.memory_space<vmem>>, %arg6: memref<24x1xf32, #tpu.memory_space<vmem>>, %arg7: memref<256x64xf32, #tpu.memory_space<vmem>>, %arg8: memref<8x24xbf16, #tpu.memory_space<vmem>>, %arg9: memref<8x1xf32, #tpu.memory_space<vmem>>, %arg10: memref<1x8x64xf32, #tpu.memory_space<vmem>>) attributes {dimension_semantics = [#tpu.dimension_semantics<parallel>], iteration_bounds = array<i64: 2>, scalar_prefetch = 0 : i64, scratch_operands = 0 : i64, tpu.core_type = #tpu.core_type<tc>, window_params = [{transform_indices = @transform_0, window_bounds = array<i64: 1, 4, 256>}, {pipeline_mode = #tpu.pipeline_mode<synchronous>, transform_indices = @transform_1, window_bounds = array<i64: 24, 4>}, {pipeline_mode = #tpu.pipeline_mode<synchronous>, transform_indices = @transform_2, window_bounds = array<i64: 24, 1>}, {pipeline_mode = #tpu.pipeline_mode<synchronous>, transform_indices = @transform_3, window_bounds = array<i64: 24, 9>}, {pipeline_mode = #tpu.pipeline_mode<synchronous>, transform_indices = @transform_4, window_bounds = array<i64: 3, 256>}, {pipeline_mode = #tpu.pipeline_mode<synchronous>, transform_indices = @transform_5, window_bounds = array<i64: 24, 1>}, {pipeline_mode = #tpu.pipeline_mode<synchronous>, transform_indices = @transform_6, window_bounds = array<i64: 256, 64>}, {pipeline_mode = #tpu.pipeline_mode<synchronous>, transform_indices = @transform_7, window_bounds = array<i64: 8, 24>}, {pipeline_mode = #tpu.pipeline_mode<synchronous>, transform_indices = @transform_8, window_bounds = array<i64: 8, 1>}, {transform_indices = @transform_9, window_bounds = array<i64: 1, 8, 64>}]} {
    %c0 = arith.constant 0 : index
    %c0_0 = arith.constant 0 : index
    %c0_1 = arith.constant 0 : index
    %0 = vector.load %arg1[%c0, %c0_0, %c0_1] : memref<1x4x256xf32, #tpu.memory_space<vmem>>, vector<1x4x256xf32>
    %1 = vector.shape_cast %0 : vector<1x4x256xf32> to vector<4x256xf32>
    %c0_2 = arith.constant 0 : index
    %c0_3 = arith.constant 0 : index
    %2 = vector.load %arg2[%c0_2, %c0_3] : memref<24x4xbf16, #tpu.memory_space<vmem>>, vector<24x4xbf16>
    %3 = arith.truncf %1 : vector<4x256xf32> to vector<4x256xbf16>
    %cst = arith.constant dense<0.000000e+00> : vector<24x256xf32>
    %4 = tpu.matmul %2, %3, %cst {dimension_numbers = #tpu.dot_dimension_numbers<[1], [0], [0], [1], [0, 0, 1, 1], [], []>} : vector<24x4xbf16>, vector<4x256xbf16>, vector<24x256xf32> -> vector<24x256xf32>
    %c0_4 = arith.constant 0 : index
    %c0_5 = arith.constant 0 : index
    %5 = vector.load %arg3[%c0_4, %c0_5] : memref<24x1xf32, #tpu.memory_space<vmem>>, vector<24x1xf32>
    %6 = vector.broadcast %5 : vector<24x1xf32> to vector<24x256xf32>
    %7 = arith.addf %4, %6 : vector<24x256xf32>
    %cst_6 = arith.constant 0.000000e+00 : f32
    %8 = vector.broadcast %cst_6 : f32 to vector<24x256xf32>
    %9 = arith.maximumf %7, %8 : vector<24x256xf32>
    %c0_7 = arith.constant 0 : index
    %c0_8 = arith.constant 0 : index
    %10 = vector.load %arg5[%c0_7, %c0_8] : memref<3x256xf32, #tpu.memory_space<vmem>>, vector<1x256xf32>
    %c2 = arith.constant 2 : index
    %c0_9 = arith.constant 0 : index
    %11 = vector.load %arg5[%c2, %c0_9] : memref<3x256xf32, #tpu.memory_space<vmem>>, vector<1x256xf32>
    %cst_10 = arith.constant 0.000000e+00 : f32
    %12 = vector.broadcast %cst_10 : f32 to vector<24x17xf32>
    %13 = tpu.concatenate %12, %9, %12 in 1 : vector<24x17xf32>, vector<24x256xf32>, vector<24x17xf32> -> vector<24x290xf32>
    %cst_11 = arith.constant 0.000000e+00 : f32
    %14 = vector.broadcast %cst_11 : f32 to vector<24x256xf32>
    %15 = vector.extract_strided_slice %13 {offsets = [0, 0], sizes = [24, 256], strides = [1, 1]} : vector<24x290xf32> to vector<24x256xf32>
    %16 = vector.broadcast %10 : vector<1x256xf32> to vector<24x256xf32>
    %17 = arith.mulf %15, %16 : vector<24x256xf32>
    %c0_12 = arith.constant 0 : index
    %c0_13 = arith.constant 0 : index
    %18 = vector.load %arg4[%c0_12, %c0_13] : memref<24x9xf32, #tpu.memory_space<vmem>>, vector<24x1xf32>
    %19 = vector.broadcast %18 : vector<24x1xf32> to vector<24x256xf32>
    %20 = arith.mulf %19, %17 : vector<24x256xf32>
    %21 = arith.addf %14, %20 : vector<24x256xf32>
    %22 = vector.extract_strided_slice %13 {offsets = [0, 1], sizes = [24, 256], strides = [1, 1]} : vector<24x290xf32> to vector<24x256xf32>
    %c0_14 = arith.constant 0 : index
    %c1 = arith.constant 1 : index
    %23 = vector.load %arg4[%c0_14, %c1] : memref<24x9xf32, #tpu.memory_space<vmem>>, vector<24x1xf32>
    %24 = vector.broadcast %23 : vector<24x1xf32> to vector<24x256xf32>
    %25 = arith.mulf %24, %22 : vector<24x256xf32>
    %26 = arith.addf %21, %25 : vector<24x256xf32>
    %27 = vector.extract_strided_slice %13 {offsets = [0, 2], sizes = [24, 256], strides = [1, 1]} : vector<24x290xf32> to vector<24x256xf32>
    %28 = vector.broadcast %11 : vector<1x256xf32> to vector<24x256xf32>
    %29 = arith.mulf %27, %28 : vector<24x256xf32>
    %c0_15 = arith.constant 0 : index
    %c2_16 = arith.constant 2 : index
    %30 = vector.load %arg4[%c0_15, %c2_16] : memref<24x9xf32, #tpu.memory_space<vmem>>, vector<24x1xf32>
    %31 = vector.broadcast %30 : vector<24x1xf32> to vector<24x256xf32>
    %32 = arith.mulf %31, %29 : vector<24x256xf32>
    %33 = arith.addf %26, %32 : vector<24x256xf32>
    %34 = vector.extract_strided_slice %13 {offsets = [0, 16], sizes = [24, 256], strides = [1, 1]} : vector<24x290xf32> to vector<24x256xf32>
    %35 = vector.broadcast %10 : vector<1x256xf32> to vector<24x256xf32>
    %36 = arith.mulf %34, %35 : vector<24x256xf32>
    %c0_17 = arith.constant 0 : index
    %c3 = arith.constant 3 : index
    %37 = vector.load %arg4[%c0_17, %c3] : memref<24x9xf32, #tpu.memory_space<vmem>>, vector<24x1xf32>
    %38 = vector.broadcast %37 : vector<24x1xf32> to vector<24x256xf32>
    %39 = arith.mulf %38, %36 : vector<24x256xf32>
    %40 = arith.addf %33, %39 : vector<24x256xf32>
    %41 = vector.extract_strided_slice %13 {offsets = [0, 17], sizes = [24, 256], strides = [1, 1]} : vector<24x290xf32> to vector<24x256xf32>
    %c0_18 = arith.constant 0 : index
    %c4 = arith.constant 4 : index
    %42 = vector.load %arg4[%c0_18, %c4] : memref<24x9xf32, #tpu.memory_space<vmem>>, vector<24x1xf32>
    %43 = vector.broadcast %42 : vector<24x1xf32> to vector<24x256xf32>
    %44 = arith.mulf %43, %41 : vector<24x256xf32>
    %45 = arith.addf %40, %44 : vector<24x256xf32>
    %46 = vector.extract_strided_slice %13 {offsets = [0, 18], sizes = [24, 256], strides = [1, 1]} : vector<24x290xf32> to vector<24x256xf32>
    %47 = vector.broadcast %11 : vector<1x256xf32> to vector<24x256xf32>
    %48 = arith.mulf %46, %47 : vector<24x256xf32>
    %c0_19 = arith.constant 0 : index
    %c5 = arith.constant 5 : index
    %49 = vector.load %arg4[%c0_19, %c5] : memref<24x9xf32, #tpu.memory_space<vmem>>, vector<24x1xf32>
    %50 = vector.broadcast %49 : vector<24x1xf32> to vector<24x256xf32>
    %51 = arith.mulf %50, %48 : vector<24x256xf32>
    %52 = arith.addf %45, %51 : vector<24x256xf32>
    %53 = vector.extract_strided_slice %13 {offsets = [0, 32], sizes = [24, 256], strides = [1, 1]} : vector<24x290xf32> to vector<24x256xf32>
    %54 = vector.broadcast %10 : vector<1x256xf32> to vector<24x256xf32>
    %55 = arith.mulf %53, %54 : vector<24x256xf32>
    %c0_20 = arith.constant 0 : index
    %c6 = arith.constant 6 : index
    %56 = vector.load %arg4[%c0_20, %c6] : memref<24x9xf32, #tpu.memory_space<vmem>>, vector<24x1xf32>
    %57 = vector.broadcast %56 : vector<24x1xf32> to vector<24x256xf32>
    %58 = arith.mulf %57, %55 : vector<24x256xf32>
    %59 = arith.addf %52, %58 : vector<24x256xf32>
    %60 = vector.extract_strided_slice %13 {offsets = [0, 33], sizes = [24, 256], strides = [1, 1]} : vector<24x290xf32> to vector<24x256xf32>
    %c0_21 = arith.constant 0 : index
    %c7 = arith.constant 7 : index
    %61 = vector.load %arg4[%c0_21, %c7] : memref<24x9xf32, #tpu.memory_space<vmem>>, vector<24x1xf32>
    %62 = vector.broadcast %61 : vector<24x1xf32> to vector<24x256xf32>
    %63 = arith.mulf %62, %60 : vector<24x256xf32>
    %64 = arith.addf %59, %63 : vector<24x256xf32>
    %65 = vector.extract_strided_slice %13 {offsets = [0, 34], sizes = [24, 256], strides = [1, 1]} : vector<24x290xf32> to vector<24x256xf32>
    %66 = vector.broadcast %11 : vector<1x256xf32> to vector<24x256xf32>
    %67 = arith.mulf %65, %66 : vector<24x256xf32>
    %c0_22 = arith.constant 0 : index
    %c8 = arith.constant 8 : index
    %68 = vector.load %arg4[%c0_22, %c8] : memref<24x9xf32, #tpu.memory_space<vmem>>, vector<24x1xf32>
    %69 = vector.broadcast %68 : vector<24x1xf32> to vector<24x256xf32>
    %70 = arith.mulf %69, %67 : vector<24x256xf32>
    %71 = arith.addf %64, %70 : vector<24x256xf32>
    %c0_23 = arith.constant 0 : index
    %c0_24 = arith.constant 0 : index
    %72 = vector.load %arg7[%c0_23, %c0_24] : memref<256x64xf32, #tpu.memory_space<vmem>>, vector<256x64xf32>
    %cst_25 = arith.constant dense<0.000000e+00> : vector<24x64xf32>
    %73 = tpu.matmul %71, %72, %cst_25 {dimension_numbers = #tpu.dot_dimension_numbers<[1], [0], [0], [1], [0, 0, 1, 1], [], []>} : vector<24x256xf32>, vector<256x64xf32>, vector<24x64xf32> -> vector<24x64xf32>
    %c0_26 = arith.constant 0 : index
    %c0_27 = arith.constant 0 : index
    %74 = vector.load %arg6[%c0_26, %c0_27] : memref<24x1xf32, #tpu.memory_space<vmem>>, vector<24x1xf32>
    %75 = vector.broadcast %74 : vector<24x1xf32> to vector<24x64xf32>
    %76 = arith.addf %73, %75 : vector<24x64xf32>
    %cst_28 = arith.constant 0.000000e+00 : f32
    %77 = vector.broadcast %cst_28 : f32 to vector<24x64xf32>
    %78 = arith.maximumf %76, %77 : vector<24x64xf32>
    %c0_29 = arith.constant 0 : index
    %c0_30 = arith.constant 0 : index
    %79 = vector.load %arg8[%c0_29, %c0_30] : memref<8x24xbf16, #tpu.memory_space<vmem>>, vector<8x24xbf16>
    %80 = arith.truncf %78 : vector<24x64xf32> to vector<24x64xbf16>
    %cst_31 = arith.constant dense<0.000000e+00> : vector<8x64xf32>
    %81 = tpu.matmul %79, %80, %cst_31 {dimension_numbers = #tpu.dot_dimension_numbers<[1], [0], [0], [1], [0, 0, 1, 1], [], []>} : vector<8x24xbf16>, vector<24x64xbf16>, vector<8x64xf32> -> vector<8x64xf32>
    %c0_32 = arith.constant 0 : index
    %c0_33 = arith.constant 0 : index
    %82 = vector.load %arg9[%c0_32, %c0_33] : memref<8x1xf32, #tpu.memory_space<vmem>>, vector<8x1xf32>
    %83 = vector.broadcast %82 : vector<8x1xf32> to vector<8x64xf32>
    %84 = arith.addf %81, %83 : vector<8x64xf32>
    %c0_34 = arith.constant 0 : index
    %c0_35 = arith.constant 0 : index
    %c0_36 = arith.constant 0 : index
    %85 = vector.load %arg10[%c0_34, %c0_35, %c0_36] : memref<1x8x64xf32, #tpu.memory_space<vmem>>, vector<1x8x64xf32>
    %86 = vector.shape_cast %85 : vector<1x8x64xf32> to vector<8x64xf32>
    %87 = vector.shape_cast %84 : vector<8x64xf32> to vector<1x8x64xf32>
    tpu.vector_store %arg10[%c0_34, %c0_35, %c0_36], %87 {strides = array<i32>} : memref<1x8x64xf32, #tpu.memory_space<vmem>>, vector<1x8x64xf32>,
    return
  }
  func.func @transform_0(%arg0: i32) -> (i32, i32, i32) {
    %c0_i32 = arith.constant 0 : i32
    %c0_i32_0 = arith.constant 0 : i32
    %c0_i32_1 = arith.constant 0 : i32
    return %arg0, %c0_i32, %c0_i32_0 : i32, i32, i32
  }
  func.func @transform_1(%arg0: i32) -> (i32, i32) {
    %c0_i32 = arith.constant 0 : i32
    %c0_i32_0 = arith.constant 0 : i32
    %c0_i32_1 = arith.constant 0 : i32
    return %c0_i32, %c0_i32_0 : i32, i32
  }
  func.func @transform_2(%arg0: i32) -> (i32, i32) {
    %c0_i32 = arith.constant 0 : i32
    %c0_i32_0 = arith.constant 0 : i32
    %c0_i32_1 = arith.constant 0 : i32
    return %c0_i32, %c0_i32_0 : i32, i32
  }
  func.func @transform_3(%arg0: i32) -> (i32, i32) {
    %c0_i32 = arith.constant 0 : i32
    %c0_i32_0 = arith.constant 0 : i32
    %c0_i32_1 = arith.constant 0 : i32
    return %c0_i32, %c0_i32_0 : i32, i32
  }
  func.func @transform_4(%arg0: i32) -> (i32, i32) {
    %c0_i32 = arith.constant 0 : i32
    %c0_i32_0 = arith.constant 0 : i32
    %c0_i32_1 = arith.constant 0 : i32
    return %c0_i32, %c0_i32_0 : i32, i32
  }
  func.func @transform_5(%arg0: i32) -> (i32, i32) {
    %c0_i32 = arith.constant 0 : i32
    %c0_i32_0 = arith.constant 0 : i32
    %c0_i32_1 = arith.constant 0 : i32
    return %c0_i32, %c0_i32_0 : i32, i32
  }
  func.func @transform_6(%arg0: i32) -> (i32, i32) {
    %c0_i32 = arith.constant 0 : i32
    %c0_i32_0 = arith.constant 0 : i32
    %c0_i32_1 = arith.constant 0 : i32
    return %c0_i32, %c0_i32_0 : i32, i32
  }
  func.func @transform_7(%arg0: i32) -> (i32, i32) {
    %c0_i32 = arith.constant 0 : i32
    %c0_i32_0 = arith.constant 0 : i32
    %c0_i32_1 = arith.constant 0 : i32
    return %c0_i32, %c0_i32_0 : i32, i32
  }
  func.func @transform_8(%arg0: i32) -> (i32, i32) {
    %c0_i32 = arith.constant 0 : i32
    %c0_i32_0 = arith.constant 0 : i32
    %c0_i32_1 = arith.constant 0 : i32
    return %c0_i32, %c0_i32_0 : i32, i32
  }
  func.func @transform_9(%arg0: i32) -> (i32, i32, i32) {
    %c0_i32 = arith.constant 0 : i32
    %c0_i32_0 = arith.constant 0 : i32
    %c0_i32_1 = arith.constant 0 : i32
    return %arg0, %c0_i32, %c0_i32_0 : i32, i32, i32
  }
}

module attributes {stable_mosaic.version = 11 : i64} {
  func.func @kernel(%arg0: i32, %arg1: memref<1x4x256xf32, #tpu.memory_space<vmem>>, %arg2: memref<24x4xbf16, #tpu.memory_space<vmem>>, %arg3: memref<24x1xf32, #tpu.memory_space<vmem>>, %arg4: memref<24x9xf32, #tpu.memory_space<vmem>>, %arg5: memref<3x256xf32, #tpu.memory_space<vmem>>, %arg6: memref<24x1xf32, #tpu.memory_space<vmem>>, %arg7: memref<256x64xf32, #tpu.memory_space<vmem>>, %arg8: memref<8x24xbf16, #tpu.memory_space<vmem>>, %arg9: memref<8x1xf32, #tpu.memory_space<vmem>>, %arg10: memref<1x8x64xf32, #tpu.memory_space<vmem>>) attributes {dimension_semantics = [#tpu.dimension_semantics<parallel>], iteration_bounds = array<i64: 2>, scalar_prefetch = 0 : i64, scratch_operands = 0 : i64, tpu.core_type = #tpu.core_type<tc>, window_params = [{transform_indices = @transform_0, window_bounds = array<i64: 1, 4, 256>}, {pipeline_mode = #tpu.pipeline_mode<synchronous>, transform_indices = @transform_1, window_bounds = array<i64: 24, 4>}, {pipeline_mode = #tpu.pipeline_mode<synchronous>, transform_indices = @transform_2, window_bounds = array<i64: 24, 1>}, {pipeline_mode = #tpu.pipeline_mode<synchronous>, transform_indices = @transform_3, window_bounds = array<i64: 24, 9>}, {pipeline_mode = #tpu.pipeline_mode<synchronous>, transform_indices = @transform_4, window_bounds = array<i64: 3, 256>}, {pipeline_mode = #tpu.pipeline_mode<synchronous>, transform_indices = @transform_5, window_bounds = array<i64: 24, 1>}, {pipeline_mode = #tpu.pipeline_mode<synchronous>, transform_indices = @transform_6, window_bounds = array<i64: 256, 64>}, {pipeline_mode = #tpu.pipeline_mode<synchronous>, transform_indices = @transform_7, window_bounds = array<i64: 8, 24>}, {pipeline_mode = #tpu.pipeline_mode<synchronous>, transform_indices = @transform_8, window_bounds = array<i64: 8, 1>}, {transform_indices = @transform_9, window_bounds = array<i64: 1, 8, 64>}]} {
    %c0 = arith.constant 0 : index
    %c0_0 = arith.constant 0 : index
    %c0_1 = arith.constant 0 : index
    %0 = vector.load %arg1[%c0, %c0_0, %c0_1] : memref<1x4x256xf32, #tpu.memory_space<vmem>>, vector<1x4x256xf32>
    %1 = vector.shape_cast %0 : vector<1x4x256xf32> to vector<4x256xf32>
    %c0_2 = arith.constant 0 : index
    %c0_3 = arith.constant 0 : index
    %2 = vector.load %arg2[%c0_2, %c0_3] : memref<24x4xbf16, #tpu.memory_space<vmem>>, vector<24x4xbf16>
    %3 = arith.truncf %1 : vector<4x256xf32> to vector<4x256xbf16>
    %cst = arith.constant dense<0.000000e+00> : vector<24x256xf32>
    %4 = tpu.matmul %2, %3, %cst {dimension_numbers = #tpu.dot_dimension_numbers<[1], [0], [0], [1], [0, 0, 1, 1], [], []>} : vector<24x4xbf16>, vector<4x256xbf16>, vector<24x256xf32> -> vector<24x256xf32>
    %c0_4 = arith.constant 0 : index
    %c0_5 = arith.constant 0 : index
    %5 = vector.load %arg3[%c0_4, %c0_5] : memref<24x1xf32, #tpu.memory_space<vmem>>, vector<24x1xf32>
    %6 = vector.broadcast %5 : vector<24x1xf32> to vector<24x256xf32>
    %7 = arith.addf %4, %6 : vector<24x256xf32>
    %cst_6 = arith.constant 0.000000e+00 : f32
    %8 = vector.broadcast %cst_6 : f32 to vector<24x256xf32>
    %9 = arith.maximumf %7, %8 : vector<24x256xf32>
    %c0_7 = arith.constant 0 : index
    %c0_8 = arith.constant 0 : index
    %10 = vector.load %arg5[%c0_7, %c0_8] : memref<3x256xf32, #tpu.memory_space<vmem>>, vector<1x256xf32>
    %c2 = arith.constant 2 : index
    %c0_9 = arith.constant 0 : index
    %11 = vector.load %arg5[%c2, %c0_9] : memref<3x256xf32, #tpu.memory_space<vmem>>, vector<1x256xf32>
    %cst_10 = arith.constant 0.000000e+00 : f32
    %12 = vector.broadcast %cst_10 : f32 to vector<24x17xf32>
    %13 = tpu.concatenate %12, %9, %12 in 1 : vector<24x17xf32>, vector<24x256xf32>, vector<24x17xf32> -> vector<24x290xf32>
    %cst_11 = arith.constant 0.000000e+00 : f32
    %14 = vector.broadcast %cst_11 : f32 to vector<24x256xf32>
    %15 = vector.extract_strided_slice %13 {offsets = [0, 0], sizes = [24, 256], strides = [1, 1]} : vector<24x290xf32> to vector<24x256xf32>
    %16 = vector.broadcast %10 : vector<1x256xf32> to vector<24x256xf32>
    %17 = arith.mulf %15, %16 : vector<24x256xf32>
    %c0_12 = arith.constant 0 : index
    %c0_13 = arith.constant 0 : index
    %18 = vector.load %arg4[%c0_12, %c0_13] : memref<24x9xf32, #tpu.memory_space<vmem>>, vector<24x1xf32>
    %19 = vector.broadcast %18 : vector<24x1xf32> to vector<24x256xf32>
    %20 = arith.mulf %19, %17 : vector<24x256xf32>
    %21 = arith.addf %14, %20 : vector<24x256xf32>
    %22 = vector.extract_strided_slice %13 {offsets = [0, 1], sizes = [24, 256], strides = [1, 1]} : vector<24x290xf32> to vector<24x256xf32>
    %c0_14 = arith.constant 0 : index
    %c1 = arith.constant 1 : index
    %23 = vector.load %arg4[%c0_14, %c1] : memref<24x9xf32, #tpu.memory_space<vmem>>, vector<24x1xf32>
    %24 = vector.broadcast %23 : vector<24x1xf32> to vector<24x256xf32>
    %25 = arith.mulf %24, %22 : vector<24x256xf32>
    %26 = arith.addf %21, %25 : vector<24x256xf32>
    %27 = vector.extract_strided_slice %13 {offsets = [0, 2], sizes = [24, 256], strides = [1, 1]} : vector<24x290xf32> to vector<24x256xf32>
    %28 = vector.broadcast %11 : vector<1x256xf32> to vector<24x256xf32>
    %29 = arith.mulf %27, %28 : vector<24x256xf32>
    %c0_15 = arith.constant 0 : index
    %c2_16 = arith.constant 2 : index
    %30 = vector.load %arg4[%c0_15, %c2_16] : memref<24x9xf32, #tpu.memory_space<vmem>>, vector<24x1xf32>
    %31 = vector.broadcast %30 : vector<24x1xf32> to vector<24x256xf32>
    %32 = arith.mulf %31, %29 : vector<24x256xf32>
    %33 = arith.addf %26, %32 : vector<24x256xf32>
    %34 = vector.extract_strided_slice %13 {offsets = [0, 16], sizes = [24, 256], strides = [1, 1]} : vector<24x290xf32> to vector<24x256xf32>
    %35 = vector.broadcast %10 : vector<1x256xf32> to vector<24x256xf32>
    %36 = arith.mulf %34, %35 : vector<24x256xf32>
    %c0_17 = arith.constant 0 : index
    %c3 = arith.constant 3 : index
    %37 = vector.load %arg4[%c0_17, %c3] : memref<24x9xf32, #tpu.memory_space<vmem>>, vector<24x1xf32>
    %38 = vector.broadcast %37 : vector<24x1xf32> to vector<24x256xf32>
    %39 = arith.mulf %38, %36 : vector<24x256xf32>
    %40 = arith.addf %33, %39 : vector<24x256xf32>
    %41 = vector.extract_strided_slice %13 {offsets = [0, 17], sizes = [24, 256], strides = [1, 1]} : vector<24x290xf32> to vector<24x256xf32>
    %c0_18 = arith.constant 0 : index
    %c4 = arith.constant 4 : index
    %42 = vector.load %arg4[%c0_18, %c4] : memref<24x9xf32, #tpu.memory_space<vmem>>, vector<24x1xf32>
    %43 = vector.broadcast %42 : vector<24x1xf32> to vector<24x256xf32>
    %44 = arith.mulf %43, %41 : vector<24x256xf32>
    %45 = arith.addf %40, %44 : vector<24x256xf32>
    %46 = vector.extract_strided_slice %13 {offsets = [0, 18], sizes = [24, 256], strides = [1, 1]} : vector<24x290xf32> to vector<24x256xf32>
    %47 = vector.broadcast %11 : vector<1x256xf32> to vector<24x256xf32>
    %48 = arith.mulf %46, %47 : vector<24x256xf32>
    %c0_19 = arith.constant 0 : index
    %c5 = arith.constant 5 : index
    %49 = vector.load %arg4[%c0_19, %c5] : memref<24x9xf32, #tpu.memory_space<vmem>>, vector<24x1xf32>
    %50 = vector.broadcast %49 : vector<24x1xf32> to vector<24x256xf32>
    %51 = arith.mulf %50, %48 : vector<24x256xf32>
    %52 = arith.addf %45, %51 : vector<24x256xf32>
    %53 = vector.extract_strided_slice %13 {offsets = [0, 32], sizes = [24, 256], strides = [1, 1]} : vector<24x290xf32> to vector<24x256xf32>
    %54 = vector.broadcast %10 : vector<1x256xf32> to vector<24x256xf32>
    %55 = arith.mulf %53, %54 : vector<24x256xf32>
    %c0_20 = arith.constant 0 : index
    %c6 = arith.constant 6 : index
    %56 = vector.load %arg4[%c0_20, %c6] : memref<24x9xf32, #tpu.memory_space<vmem>>, vector<24x1xf32>
    %57 = vector.broadcast %56 : vector<24x1xf32> to vector<24x256xf32>
    %58 = arith.mulf %57, %55 : vector<24x256xf32>
    %59 = arith.addf %52, %58 : vector<24x256xf32>
    %60 = vector.extract_strided_slice %13 {offsets = [0, 33], sizes = [24, 256], strides = [1, 1]} : vector<24x290xf32> to vector<24x256xf32>
    %c0_21 = arith.constant 0 : index
    %c7 = arith.constant 7 : index
    %61 = vector.load %arg4[%c0_21, %c7] : memref<24x9xf32, #tpu.memory_space<vmem>>, vector<24x1xf32>
    %62 = vector.broadcast %61 : vector<24x1xf32> to vector<24x256xf32>
    %63 = arith.mulf %62, %60 : vector<24x256xf32>
    %64 = arith.addf %59, %63 : vector<24x256xf32>
    %65 = vector.extract_strided_slice %13 {offsets = [0, 34], sizes = [24, 256], strides = [1, 1]} : vector<24x290xf32> to vector<24x256xf32>
    %66 = vector.broadcast %11 : vector<1x256xf32> to vector<24x256xf32>
    %67 = arith.mulf %65, %66 : vector<24x256xf32>
    %c0_22 = arith.constant 0 : index
    %c8 = arith.constant 8 : index
    %68 = vector.load %arg4[%c0_22, %c8] : memref<24x9xf32, #tpu.memory_space<vmem>>, vector<24x1xf32>
    %69 = vector.broadcast %68 : vector<24x1xf32> to vector<24x256xf32>
    %70 = arith.mulf %69, %67 : vector<24x256xf32>
    %71 = arith.addf %64, %70 : vector<24x256xf32>
    %c0_23 = arith.constant 0 : index
    %c0_24 = arith.constant 0 : index
    %72 = vector.load %arg7[%c0_23, %c0_24] : memref<256x64xf32, #tpu.memory_space<vmem>>, vector<256x64xf32>
    %cst_25 = arith.constant dense<0.000000e+00> : vector<24x64xf32>
    %73 = tpu.matmul %71, %72, %cst_25 {dimension_numbers = #tpu.dot_dimension_numbers<[1], [0], [0], [1], [0, 0, 1, 1], [], []>} : vector<24x256xf32>, vector<256x64xf32>, vector<24x64xf32> -> vector<24x64xf32>
    %c0_26 = arith.constant 0 : index
    %c0_27 = arith.constant 0 : index
    %74 = vector.load %arg6[%c0_26, %c0_27] : memref<24x1xf32, #tpu.memory_space<vmem>>, vector<24x1xf32>
    %75 = vector.broadcast %74 : vector<24x1xf32> to vector<24x64xf32>
    %76 = arith.addf %73, %75 : vector<24x64xf32>
    %cst_28 = arith.constant 0.000000e+00 : f32
    %77 = vector.broadcast %cst_28 : f32 to vector<24x64xf32>
    %78 = arith.maximumf %76, %77 : vector<24x64xf32>
    %c0_29 = arith.constant 0 : index
    %c0_30 = arith.constant 0 : index
    %79 = vector.load %arg8[%c0_29, %c0_30] : memref<8x24xbf16, #tpu.memory_space<vmem>>, vector<8x24xbf16>
    %80 = arith.truncf %78 : vector<24x64xf32> to vector<24x64xbf16>
    %cst_31 = arith.constant dense<0.000000e+00> : vector<8x64xf32>
    %81 = tpu.matmul %79, %80, %cst_31 {dimension_numbers = #tpu.dot_dimension_numbers<[1], [0], [0], [1], [0, 0, 1, 1], [], []>} : vector<8x24xbf16>, vector<24x64xbf16>, vector<8x64xf32> -> vector<8x64xf32>
    %c0_32 = arith.constant 0 : index
    %c0_33 = arith.constant 0 : index
    %82 = vector.load %arg9[%c0_32, %c0_33] : memref<8x1xf32, #tpu.memory_space<vmem>>, vector<8x1xf32>
    %83 = vector.broadcast %82 : vector<8x1xf32> to vector<8x64xf32>
    %84 = arith.addf %81, %83 : vector<8x64xf32>
    %c0_34 = arith.constant 0 : index
    %c0_35 = arith.constant 0 : index
    %c0_36 = arith.constant 0 : index
    %85 = vector.load %arg10[%c0_34, %c0_35, %c0_36] : memref<1x8x64xf32, #tpu.memory_space<vmem>>, vector<1x8x64xf32>
    %86 = vector.shape_cast %85 : vector<1x8x64xf32> to vector<8x64xf32>
    %87 = vector.shape_cast %84 : vector<8x64xf32> to vector<1x8x64xf32>
    tpu.vector_store %arg10[%c0_34, %c0_35, %c0_36], %87 {strides = array<i32>} : memref<1x8x64xf32, #tpu.memory_space<vmem>>, vector<1x8x64xf32>,
    return
  }
  func.func @transform_0(%arg0: i32) -> (i32, i32, i32) {
    %c0_i32 = arith.constant 0 : i32
    %c0_i32_0 = arith.constant 0 : i32
    %c0_i32_1 = arith.constant 0 : i32
    return %arg0, %c0_i32, %c0_i32_0 : i32, i32, i32
  }
  func.func @transform_1(%arg0: i32) -> (i32, i32) {
    %c0_i32 = arith.constant 0 : i32
    %c0_i32_0 = arith.constant 0 : i32
    %c0_i32_1 = arith.constant 0 : i32
    return %c0_i32, %c0_i32_0 : i32, i32
  }
  func.func @transform_2(%arg0: i32) -> (i32, i32) {
    %c0_i32 = arith.constant 0 : i32
    %c0_i32_0 = arith.constant 0 : i32
    %c0_i32_1 = arith.constant 0 : i32
    return %c0_i32, %c0_i32_0 : i32, i32
  }
  func.func @transform_3(%arg0: i32) -> (i32, i32) {
    %c0_i32 = arith.constant 0 : i32
    %c0_i32_0 = arith.constant 0 : i32
    %c0_i32_1 = arith.constant 0 : i32
    return %c0_i32, %c0_i32_0 : i32, i32
  }
  func.func @transform_4(%arg0: i32) -> (i32, i32) {
    %c0_i32 = arith.constant 0 : i32
    %c0_i32_0 = arith.constant 0 : i32
    %c0_i32_1 = arith.constant 0 : i32
    return %c0_i32, %c0_i32_0 : i32, i32
  }
  func.func @transform_5(%arg0: i32) -> (i32, i32) {
    %c0_i32 = arith.constant 0 : i32
    %c0_i32_0 = arith.constant 0 : i32
    %c0_i32_1 = arith.constant 0 : i32
    return %c0_i32, %c0_i32_0 : i32, i32
  }
  func.func @transform_6(%arg0: i32) -> (i32, i32) {
    %c0_i32 = arith.constant 0 : i32
    %c0_i32_0 = arith.constant 0 : i32
    %c0_i32_1 = arith.constant 0 : i32
    return %c0_i32, %c0_i32_0 : i32, i32
  }
  func.func @transform_7(%arg0: i32) -> (i32, i32) {
    %c0_i32 = arith.constant 0 : i32
    %c0_i32_0 = arith.constant 0 : i32
    %c0_i32_1 = arith.constant 0 : i32
    return %c0_i32, %c0_i32_0 : i32, i32
  }
  func.func @transform_8(%arg0: i32) -> (i32, i32) {
    %c0_i32 = arith.constant 0 : i32
    %c0_i32_0 = arith.constant 0 : i32
    %c0_i32_1 = arith.constant 0 : i32
    return %c0_i32, %c0_i32_0 : i32, i32
  }
  func.func @transform_9(%arg0: i32) -> (i32, i32, i32) {
    %c0_i32 = arith.constant 0 : i32
    %c0_i32_0 = arith.constant 0 : i32
    %c0_i32_1 = arith.constant 0 : i32
    return %arg0, %c0_i32, %c0_i32_0 : i32, i32, i32
  }
}

</mosaic_0001>

<llo_original>
// kernel: tpu_custom_call.1
$region0: #{tpu_custom_call.1}
  #allocation0 [shape = 'u32[]', space=smem, size = 0x4, offset = 0x4, fixed_abs, tag = 'smem constant byte address 0x4 - core index']
  #allocation1 [shape = 'u32[144,128]{1,0:T(1,128)}', space=vmem, size = 0x12000, scoped, tag = 'internal scratch']
  %s0 = inlined_call_operand.vmem [shape: f32[2,4,256], index: 0, kind: input, shape index: {}]
  %s1 = inlined_call_operand.vmem [shape: bf16[24,4], index: 1, kind: input, shape index: {}]
  %s2 = inlined_call_operand.vmem [shape: f32[24,1], index: 2, kind: input, shape index: {}]
  %s3 = inlined_call_operand.vmem [shape: f32[24,9], index: 3, kind: input, shape index: {}]
  %s4 = inlined_call_operand.vmem [shape: f32[3,256], index: 4, kind: input, shape index: {}]
  %s5 = inlined_call_operand.vmem [shape: f32[24,1], index: 5, kind: input, shape index: {}]
  %s6 = inlined_call_operand.vmem [shape: f32[256,64], index: 6, kind: input, shape index: {}]
  %s7 = inlined_call_operand.vmem [shape: bf16[8,24], index: 7, kind: input, shape index: {}]
  %s8 = inlined_call_operand.vmem [shape: f32[8,1], index: 8, kind: input, shape index: {}]
  %s9 = inlined_call_operand.hbm [shape: f32[2,8,64], index: 9, kind: output, shape index: {}]
  %s10 = sld [smem:[#allocation0]]
  $region69: #{tpu_custom_call.1} parent=0
    _
  %s12 = ssub.s32 1, %s10
  %s13 = scalar_select 0, %s12, %s10
  $region1: #{tpu_custom_call.1} parent=0
    #allocation2 [shape = 'u8[8192]{0}', space=vmem, size = 0x2000, scoped, tag = 'output window, operand 0']
    #allocation3 [shape = 's32[2]{0}', space=sflag, size = 0x8, scoped, tag = 'scoped memory for tpu_custom_call.1']
    %14 = vsyncpa [#allocation3], 0
    %s15 = scalar_lea.sflag [#allocation3], 1
    %16 = vsyncpa %s15, 0
    loop: start=0, step=1, limit=4
    $region2: #{tpu_custom_call.1} parent=1 // loop_pre_header
      _
    $region3: #{tpu_custom_call.1} parent=1 // loop_header
      %s18 = sphi 0, %s22
      %p19 = scmp.ge.s32.totalorder %s18, 4
      %s28 = sphi 0, %s30
      %s31 = sphi 0, %s28
      %s32 = sphi 0, %s31
      %s48 = sphi 0, %s32
      %s52 = sphi 0, %s52
      %s54 = sphi 0, %s52
      %s55 = sphi 0, %s54
      %s69 = sphi 0, %s55
      %s73 = sphi 0, %s73
      %s75 = sphi 0, %s73
      %s76 = sphi 0, %s75
      %s90 = sphi 0, %s76
      %s94 = sphi 0, %s94
      %s96 = sphi 0, %s94
      %s97 = sphi 0, %s96
      %s111 = sphi 0, %s97
      %s115 = sphi 0, %s115
      %s117 = sphi 0, %s115
      %s118 = sphi 0, %s117
      %s132 = sphi 0, %s118
      %s136 = sphi 0, %s136
      %s138 = sphi 0, %s136
      %s139 = sphi 0, %s138
      %s153 = sphi 0, %s139
      %s157 = sphi 0, %s157
      %s159 = sphi 0, %s157
      %s160 = sphi 0, %s159
      %s174 = sphi 0, %s160
      %s178 = sphi 0, %s178
      %s180 = sphi 0, %s178
      %s181 = sphi 0, %s180
      %s195 = sphi 0, %s181
      %s199 = sphi 0, %s199
      %s201 = sphi 0, %s199
      %s202 = sphi 0, %s201
      %s216 = sphi 0, %s202
      %s222 = sphi 0, %s224
      %s225 = sphi 0, %s222
      %s226 = sphi 0, %s225
      %s242 = sphi 0, %s226
    $region4: #{tpu_custom_call.1} parent=1 // loop_header_branch
      %21 = sbr.rel (%p19) target = $region8
    $region5: #{tpu_custom_call.1} parent=1 // loop_body
      %s23 = ssub.s32 %s18, 1
      %s24 = ssub.s32 %s18, 2
      %s25 = sadd.s32 %s18, 1
      %s26 = ssub.s32 %s18, %s25
      %p27 = scmp.eq.s32.totalorder %s26, 0
      %s29 = sadd.s32 %s28, 1
      %s30 = scalar_select %p27, %s28, %s29
      %p33 = pneg %p27
      %p34 = scmp.eq.s32.totalorder %s18, 1
      %p35 = por %p33, %p34
      %p36 = scmp.ne.s32.totalorder %s28, %s31
      %p37 = scmp.eq.s32.totalorder %s18, 0
      %p38 = por %p36, %p37
      %p39 = scmp.ne.s32.totalorder %s28, %s31
      %p40 = scmp.eq.s32.totalorder %s23, 1
      %p41 = por %p39, %p40
      %p42 = scmp.ne.s32.totalorder %s31, %s32
      %p43 = scmp.eq.s32.totalorder %s23, 0
      %p44 = por %p42, %p43
      %p45 = scmp.ne.s32.totalorder %s31, %s32
      %p46 = scmp.eq.s32.totalorder %s24, 1
      %p47 = por %p45, %p46
      %p49 = scmp.ne.s32.totalorder %s32, %s48
      %p50 = scmp.eq.s32.totalorder %s24, 0
      %p51 = por %p49, %p50
      %s53 = sadd.s32 %s52, 1
      %p56 = scmp.eq.s32.totalorder %s18, 1
      %p57 = scmp.ne.s32.totalorder %s52, %s54
      %p58 = scmp.eq.s32.totalorder %s18, 0
      %p59 = por %p57, %p58
      %p60 = scmp.ne.s32.totalorder %s52, %s54
      %p61 = scmp.eq.s32.totalorder %s23, 1
      %p62 = por %p60, %p61
      %p63 = scmp.ne.s32.totalorder %s54, %s55
      %p64 = scmp.eq.s32.totalorder %s23, 0
      %p65 = por %p63, %p64
      %p66 = scmp.ne.s32.totalorder %s54, %s55
      %p67 = scmp.eq.s32.totalorder %s24, 1
      %p68 = por %p66, %p67
      %p70 = scmp.ne.s32.totalorder %s55, %s69
      %p71 = scmp.eq.s32.totalorder %s24, 0
      %p72 = por %p70, %p71
      %s74 = sadd.s32 %s73, 1
      %p77 = scmp.eq.s32.totalorder %s18, 1
      %p78 = scmp.ne.s32.totalorder %s73, %s75
      %p79 = scmp.eq.s32.totalorder %s18, 0
      %p80 = por %p78, %p79
      %p81 = scmp.ne.s32.totalorder %s73, %s75
      %p82 = scmp.eq.s32.totalorder %s23, 1
      %p83 = por %p81, %p82
      %p84 = scmp.ne.s32.totalorder %s75, %s76
      %p85 = scmp.eq.s32.totalorder %s23, 0
      %p86 = por %p84, %p85
      %p87 = scmp.ne.s32.totalorder %s75, %s76
      %p88 = scmp.eq.s32.totalorder %s24, 1
      %p89 = por %p87, %p88
      %p91 = scmp.ne.s32.totalorder %s76, %s90
      %p92 = scmp.eq.s32.totalorder %s24, 0
      %p93 = por %p91, %p92
      %s95 = sadd.s32 %s94, 1
      %p98 = scmp.eq.s32.totalorder %s18, 1
      %p99 = scmp.ne.s32.totalorder %s94, %s96
      %p100 = scmp.eq.s32.totalorder %s18, 0
      %p101 = por %p99, %p100
      %p102 = scmp.ne.s32.totalorder %s94, %s96
      %p103 = scmp.eq.s32.totalorder %s23, 1
      %p104 = por %p102, %p103
      %p105 = scmp.ne.s32.totalorder %s96, %s97
      %p106 = scmp.eq.s32.totalorder %s23, 0
      %p107 = por %p105, %p106
      %p108 = scmp.ne.s32.totalorder %s96, %s97
      %p109 = scmp.eq.s32.totalorder %s24, 1
      %p110 = por %p108, %p109
      %p112 = scmp.ne.s32.totalorder %s97, %s111
      %p113 = scmp.eq.s32.totalorder %s24, 0
      %p114 = por %p112, %p113
      %s116 = sadd.s32 %s115, 1
      %p119 = scmp.eq.s32.totalorder %s18, 1
      %p120 = scmp.ne.s32.totalorder %s115, %s117
      %p121 = scmp.eq.s32.totalorder %s18, 0
      %p122 = por %p120, %p121
      %p123 = scmp.ne.s32.totalorder %s115, %s117
      %p124 = scmp.eq.s32.totalorder %s23, 1
      %p125 = por %p123, %p124
      %p126 = scmp.ne.s32.totalorder %s117, %s118
      %p127 = scmp.eq.s32.totalorder %s23, 0
      %p128 = por %p126, %p127
      %p129 = scmp.ne.s32.totalorder %s117, %s118
      %p130 = scmp.eq.s32.totalorder %s24, 1
      %p131 = por %p129, %p130
      %p133 = scmp.ne.s32.totalorder %s118, %s132
      %p134 = scmp.eq.s32.totalorder %s24, 0
      %p135 = por %p133, %p134
      %s137 = sadd.s32 %s136, 1
      %p140 = scmp.eq.s32.totalorder %s18, 1
      %p141 = scmp.ne.s32.totalorder %s136, %s138
      %p142 = scmp.eq.s32.totalorder %s18, 0
      %p143 = por %p141, %p142
      %p144 = scmp.ne.s32.totalorder %s136, %s138
      %p145 = scmp.eq.s32.totalorder %s23, 1
      %p146 = por %p144, %p145
      %p147 = scmp.ne.s32.totalorder %s138, %s139
      %p148 = scmp.eq.s32.totalorder %s23, 0
      %p149 = por %p147, %p148
      %p150 = scmp.ne.s32.totalorder %s138, %s139
      %p151 = scmp.eq.s32.totalorder %s24, 1
      %p152 = por %p150, %p151
      %p154 = scmp.ne.s32.totalorder %s139, %s153
      %p155 = scmp.eq.s32.totalorder %s24, 0
      %p156 = por %p154, %p155
      %s158 = sadd.s32 %s157, 1
      %p161 = scmp.eq.s32.totalorder %s18, 1
      %p162 = scmp.ne.s32.totalorder %s157, %s159
      %p163 = scmp.eq.s32.totalorder %s18, 0
      %p164 = por %p162, %p163
      %p165 = scmp.ne.s32.totalorder %s157, %s159
      %p166 = scmp.eq.s32.totalorder %s23, 1
      %p167 = por %p165, %p166
      %p168 = scmp.ne.s32.totalorder %s159, %s160
      %p169 = scmp.eq.s32.totalorder %s23, 0
      %p170 = por %p168, %p169
      %p171 = scmp.ne.s32.totalorder %s159, %s160
      %p172 = scmp.eq.s32.totalorder %s24, 1
      %p173 = por %p171, %p172
      %p175 = scmp.ne.s32.totalorder %s160, %s174
      %p176 = scmp.eq.s32.totalorder %s24, 0
      %p177 = por %p175, %p176
      %s179 = sadd.s32 %s178, 1
      %p182 = scmp.eq.s32.totalorder %s18, 1
      %p183 = scmp.ne.s32.totalorder %s178, %s180
      %p184 = scmp.eq.s32.totalorder %s18, 0
      %p185 = por %p183, %p184
      %p186 = scmp.ne.s32.totalorder %s178, %s180
      %p187 = scmp.eq.s32.totalorder %s23, 1
      %p188 = por %p186, %p187
      %p189 = scmp.ne.s32.totalorder %s180, %s181
      %p190 = scmp.eq.s32.totalorder %s23, 0
      %p191 = por %p189, %p190
      %p192 = scmp.ne.s32.totalorder %s180, %s181
      %p193 = scmp.eq.s32.totalorder %s24, 1
      %p194 = por %p192, %p193
      %p196 = scmp.ne.s32.totalorder %s181, %s195
      %p197 = scmp.eq.s32.totalorder %s24, 0
      %p198 = por %p196, %p197
      %s200 = sadd.s32 %s199, 1
      %p203 = scmp.eq.s32.totalorder %s18, 1
      %p204 = scmp.ne.s32.totalorder %s199, %s201
      %p205 = scmp.eq.s32.totalorder %s18, 0
      %p206 = por %p204, %p205
      %p207 = scmp.ne.s32.totalorder %s199, %s201
      %p208 = scmp.eq.s32.totalorder %s23, 1
      %p209 = por %p207, %p208
      %p210 = scmp.ne.s32.totalorder %s201, %s202
      %p211 = scmp.eq.s32.totalorder %s23, 0
      %p212 = por %p210, %p211
      %p213 = scmp.ne.s32.totalorder %s201, %s202
      %p214 = scmp.eq.s32.totalorder %s24, 1
      %p215 = por %p213, %p214
      %p217 = scmp.ne.s32.totalorder %s202, %s216
      %p218 = scmp.eq.s32.totalorder %s24, 0
      %p219 = por %p217, %p218
      %s220 = ssub.s32 %s18, %s25
      %p221 = scmp.eq.s32.totalorder %s220, 0
      %s223 = sadd.s32 %s222, 1
      %s224 = scalar_select %p221, %s222, %s223
      %p227 = pneg %p221
      %p228 = scmp.eq.s32.totalorder %s18, 1
      %p229 = por %p227, %p228
      %p230 = scmp.ne.s32.totalorder %s222, %s225
      %p231 = scmp.eq.s32.totalorder %s18, 0
      %p232 = por %p230, %p231
      %p233 = scmp.ne.s32.totalorder %s222, %s225
      %p234 = scmp.eq.s32.totalorder %s23, 1
      %p235 = por %p233, %p234
      %p236 = scmp.ne.s32.totalorder %s225, %s226
      %p237 = scmp.eq.s32.totalorder %s23, 0
      %p238 = por %p236, %p237
      %p239 = scmp.ne.s32.totalorder %s225, %s226
      %p240 = scmp.eq.s32.totalorder %s24, 1
      %p241 = por %p239, %p240
      %p243 = scmp.ne.s32.totalorder %s226, %s242
      %p244 = scmp.eq.s32.totalorder %s24, 0
      %p245 = por %p243, %p244
      %p246 = scmp.le.s32.totalorder 1, %s18
      %p247 = scmp.lt.s32.totalorder %s18, 3
      %p248 = pnand %p246, %p247
      %p249 = pneg %p248
      // Predicated region
      $region9: #{tpu_custom_call.1} parent=5 // pred_check
        _
      $region10: #{tpu_custom_call.1} parent=5 // pred_check_branch
        %251 = sbr.rel (%p248) target = $region12
      $region11: #{tpu_custom_call.1} parent=5 // pred_region
        %s252 = ssub.s32 %s18, 1
        // Predicated region
        $region13: #{tpu_custom_call.1} parent=11 // pred_check
          %p253 = pneg %p65
        $region14: #{tpu_custom_call.1} parent=11 // pred_check_branch
          %255 = sbr.rel (%p253) target = $region16
        $region15: #{tpu_custom_call.1} parent=11 // pred_region
          _
        $region16: #{tpu_custom_call.1} parent=11 // pred_fallthru
          _
        // Predicated region
        $region17: #{tpu_custom_call.1} parent=11 // pred_check
          %p256 = pneg %p86
        $region18: #{tpu_custom_call.1} parent=11 // pred_check_branch
          %258 = sbr.rel (%p256) target = $region20
        $region19: #{tpu_custom_call.1} parent=11 // pred_region
          _
        $region20: #{tpu_custom_call.1} parent=11 // pred_fallthru
          _
        // Predicated region
        $region21: #{tpu_custom_call.1} parent=11 // pred_check
          %p259 = pneg %p107
        $region22: #{tpu_custom_call.1} parent=11 // pred_check_branch
          %261 = sbr.rel (%p259) target = $region24
        $region23: #{tpu_custom_call.1} parent=11 // pred_region
          _
        $region24: #{tpu_custom_call.1} parent=11 // pred_fallthru
          _
        // Predicated region
        $region25: #{tpu_custom_call.1} parent=11 // pred_check
          %p262 = pneg %p128
        $region26: #{tpu_custom_call.1} parent=11 // pred_check_branch
          %264 = sbr.rel (%p262) target = $region28
        $region27: #{tpu_custom_call.1} parent=11 // pred_region
          _
        $region28: #{tpu_custom_call.1} parent=11 // pred_fallthru
          _
        // Predicated region
        $region29: #{tpu_custom_call.1} parent=11 // pred_check
          %p265 = pneg %p149
        $region30: #{tpu_custom_call.1} parent=11 // pred_check_branch
          %267 = sbr.rel (%p265) target = $region32
        $region31: #{tpu_custom_call.1} parent=11 // pred_region
          _
        $region32: #{tpu_custom_call.1} parent=11 // pred_fallthru
          _
        // Predicated region
        $region33: #{tpu_custom_call.1} parent=11 // pred_check
          %p268 = pneg %p170
        $region34: #{tpu_custom_call.1} parent=11 // pred_check_branch
          %270 = sbr.rel (%p268) target = $region36
        $region35: #{tpu_custom_call.1} parent=11 // pred_region
          _
        $region36: #{tpu_custom_call.1} parent=11 // pred_fallthru
          _
        // Predicated region
        $region37: #{tpu_custom_call.1} parent=11 // pred_check
          %p271 = pneg %p191
        $region38: #{tpu_custom_call.1} parent=11 // pred_check_branch
          %273 = sbr.rel (%p271) target = $region40
        $region39: #{tpu_custom_call.1} parent=11 // pred_region
          _
        $region40: #{tpu_custom_call.1} parent=11 // pred_fallthru
          _
        // Predicated region
        $region41: #{tpu_custom_call.1} parent=11 // pred_check
          %p274 = pneg %p212
        $region42: #{tpu_custom_call.1} parent=11 // pred_check_branch
          %276 = sbr.rel (%p274) target = $region44
        $region43: #{tpu_custom_call.1} parent=11 // pred_region
          _
        $region44: #{tpu_custom_call.1} parent=11 // pred_fallthru
          _
      $region12: #{tpu_custom_call.1} parent=5 // pred_fallthru
        _
      %p277 = scmp.lt.s32.totalorder %s18, 2
      // Predicated region
      $region45: #{tpu_custom_call.1} parent=5 // pred_check
        %p278 = pneg %p277
      $region46: #{tpu_custom_call.1} parent=5 // pred_check_branch
        %280 = sbr.rel (%p278) target = $region48
      $region47: #{tpu_custom_call.1} parent=5 // pred_region
        // Predicated region
        $region49: #{tpu_custom_call.1} parent=47 // pred_check
          %p281 = pneg %p38
        $region50: #{tpu_custom_call.1} parent=47 // pred_check_branch
          %283 = sbr.rel (%p281) target = $region52
        $region51: #{tpu_custom_call.1} parent=47 // pred_region
          %p284 = scmp.lt.s32.totalorder %s18, 1
          %s285 = scalar_select %p284, %s18, 1
          %s286 = smul.addr %s285, 2
          %s287 = smul.addr %s286, 4
          %s288 = scalar_lea.vmem %s0, %s287
        $region52: #{tpu_custom_call.1} parent=47 // pred_fallthru
          _
      $region48: #{tpu_custom_call.1} parent=5 // pred_fallthru
        _
      %p289 = scmp.le.s32.totalorder 1, %s18
      %p290 = scmp.lt.s32.totalorder %s18, 3
      %p291 = pnand %p289, %p290
      %p292 = pneg %p291
      // Predicated region
      $region53: #{tpu_custom_call.1} parent=5 // pred_check
        _
      $region54: #{tpu_custom_call.1} parent=5 // pred_check_branch
        %294 = sbr.rel (%p291) target = $region56
      $region55: #{tpu_custom_call.1} parent=5 // pred_region
        %s295 = ssub.s32 %s18, 1
        %p296 = scmp.lt.s32.totalorder %s23, 1
        %s297 = scalar_select %p296, %s23, 1
        %s298 = smul.addr %s297, 2
        %s299 = smul.addr %s298, 4
        %s300 = scalar_lea.vmem %s0, %s299
        %p301 = pneg %p44
        %p302 = pneg %p41
        %p303 = pneg %p65
        %p304 = pneg %p62
        %p305 = pneg %p86
        %p306 = pneg %p83
        %p307 = pneg %p107
        %p308 = pneg %p104
        %p309 = pneg %p128
        %p310 = pneg %p125
        %p311 = pneg %p149
        %p312 = pneg %p146
        %p313 = pneg %p170
        %p314 = pneg %p167
        %p315 = pneg %p191
        %p316 = pneg %p188
        %p317 = pneg %p212
        %p318 = pneg %p209
        %p319 = pneg %p238
        %p320 = pneg %p235
        %s321 = sand.u32 %s225, 1
        %s322 = scalar_lea.sflag [#allocation3], %s321
        %s323 = sand.u32 %s225, 1
        %s324 = smul.addr %s323, 8
        %s325 = scalar_lea.vmem [#allocation2], %s324
        %p326 = scmp.lt.s32.totalorder %s23, 1
        %s327 = scalar_select %p326, %s23, 1
        %s328 = smul.addr %s327, 2
        %s329 = smul.addr %s328, 4
        %s330 = scalar_lea.vmem %s0, %s329
        %v332 = vld [vmem:[%s330] sm:$0xff]
        %v333 = vld [vmem:[%s1] sm:$0xf]
        %v334 = vld [vmem:[%s1 + $0x4] sm:$0xf]
        %v335 = vld [vmem:[%s1 + $0x8] sm:$0xf]
        %v337 = vcombine.high %v332, %v332
        %v339 = vpack.c.bf16 %v332, %v332
        %v340 = vpack.c.bf16 %v337, %v337
        %v341 = vld [vmem:[%s2] sm:$0xff]
        %v342 = vld [vmem:[%s2 + $0x8] sm:$0xff]
        %v343 = vld [vmem:[%s2 + $0x10] sm:$0xff]
        %345 = vset.pattern.permute.xlu0 0
        %346 = vperm.xlu0 %345, %v341
        %v347 = vpop.permute.xlu0 %346
        %350 = vset.pattern.permute.xlu0 0
        %351 = vperm.xlu0 %350, %v342
        %v352 = vpop.permute.xlu0 %351
        %355 = vset.pattern.permute.xlu0 0
        %356 = vperm.xlu0 %355, %v343
        %v357 = vpop.permute.xlu0 %356
        %v362 = vunpack.c.l.b16 %v333
        %v363 = vunpack.c.l.b16 %v334
        %v364 = vunpack.c.l.b16 %v335
        %v365 = vpack.c.b16 %v363, %v362
        %v366 = vpack.c.b16 %v364, %v364
        %vm367 = vcmask 31744
        %v369 = vsel %vm367, %v365, 0
        %v372 = vsel %vm367, %v366, 0
        %vm374 = vcmask 1041408
        %v376 = vsel %vm374, %v339, 0
        %v379 = vsel %vm374, %v340, 0
        %381 = vmatprep.subr.bf16.mxu0 %v379
        %382 = vmatpush1.bf16.msra.mxu0 %v376
        %383 = vmatprep.subr.bf16.mxu0 0
        %384 = vmatpush1.bf16.msra.mxu0 0
        %385 = vmatprep.subr.bf16.mxu0 0
        %386 = vmatpush1.bf16.msra.mxu0 0
        %387 = vmatprep.subr.bf16.mxu0 0
        %388 = vmatpush1.bf16.msra.mxu0 0
        %389 = vmatprep.subr.bf16.mxu0 0
        %390 = vmatpush1.bf16.msra.mxu0 0
        %391 = vmatprep.subr.bf16.mxu0 0
        %392 = vmatpush1.bf16.msra.mxu0 0
        %393 = vmatprep.subr.bf16.mxu0 0
        %394 = vmatpush1.bf16.msra.mxu0 0
        %395 = vmatprep.subr.bf16.mxu0 0
        %396 = vmatpush1.bf16.msra.mxu0 0
        %397 = vmatprep.subr.bf16.mxu0 0
        %398 = vmatpush1.bf16.msra.mxu0 0
        %399 = vmatprep.subr.bf16.mxu0 0
        %400 = vmatpush1.bf16.msra.mxu0 0
        %401 = vmatprep.subr.bf16.mxu0 0
        %402 = vmatpush1.bf16.msra.mxu0 0
        %403 = vmatprep.subr.bf16.mxu0 0
        %404 = vmatpush1.bf16.msra.mxu0 0
        %405 = vmatprep.subr.bf16.mxu0 0
        %406 = vmatpush1.bf16.msra.mxu0 0
        %407 = vmatprep.subr.bf16.mxu0 0
        %408 = vmatpush1.bf16.msra.mxu0 0
        %409 = vmatprep.subr.bf16.mxu0 0
        %410 = vmatpush1.bf16.msra.mxu0 0
        %411 = vmatprep.subr.bf16.mxu0 0
        %412 = vmatpush1.bf16.msra.mxu0 0
        %413 = vmatprep.mubr.bf16.mxu0 0
        %414 = vmatmul.mubr.bf16.gmra.mrb[0].mxu0 %v369
        %v415 = vpop.f32.mrb[0].mxu0
        %v416 = vadd.f32 %v347, %v415
        %v417 = vpop.f32.mrb[0].mxu0
        %v418 = vadd.f32 %v347, %v417
        %v419 = vpop.f32.mrb[0].mxu0
        %v420 = vadd.f32 %v352, %v419
        %v421 = vpop.f32.mrb[0].mxu0
        %v422 = vadd.f32 %v352, %v421
        %423 = vmatprep.mubr.bf16.mxu0 0
        %424 = vmatmul.mubr.bf16.gmra.mrb[0].mxu0 %v372
        %v425 = vpop.f32.mrb[0].mxu0
        %v426 = vadd.f32 %v357, %v425
        %v427 = vpop.f32.mrb[0].mxu0
        %v428 = vadd.f32 %v357, %v427
        %v429 = vpop.f32.mrb[0].mxu0
        %v430 = vpop.f32.mrb[0].mxu0
        %431 = vdwg.mxu0
        %v432 = vmax.f32 %v416, 0.0
        %v433 = vmax.f32 %v418, 0.0
        %v434 = vmax.f32 %v420, 0.0
        %v435 = vmax.f32 %v422, 0.0
        %v436 = vmax.f32 %v426, 0.0
        %v437 = vmax.f32 %v428, 0.0
        %v438 = vld [vmem:[%s4] ss:$4 sm:$0x3]
        %s439 = scalar_lea.vmem %s4, 2
        %v440 = vld [vmem:[%s439] ss:$4 sm:$0x3]
        %447 = vrot.lane.b32.xlu0 %v432, 17
        %v448 = vpop.permute.xlu0 %447
        %449 = vrot.lane.b32.xlu0 %v433, 17
        %v450 = vpop.permute.xlu0 %449
        %451 = vrot.lane.b32.xlu0 %v434, 17
        %v452 = vpop.permute.xlu0 %451
        %453 = vrot.lane.b32.xlu0 %v435, 17
        %v454 = vpop.permute.xlu0 %453
        %455 = vrot.lane.b32.xlu0 %v436, 17
        %v456 = vpop.permute.xlu0 %455
        %457 = vrot.lane.b32.xlu0 %v437, 17
        %v458 = vpop.permute.xlu0 %457
        %vm459 = vcmask 138240
        %v460 = vsel %vm459, %v448, %v450
        %v461 = vsel %vm459, %v452, %v454
        %v462 = vsel %vm459, %v456, %v458
        %v472 = vsel %vm459, 0.0, %v448
        %v473 = vsel %vm459, 0.0, %v452
        %v474 = vsel %vm459, 0.0, %v456
        %v475 = vsel %vm459, %v450, 0.0
        %v476 = vsel %vm459, %v454, 0.0
        %v477 = vsel %vm459, %v458, 0.0
        %v479 = vlaneseq
        %v480 = vshrl.u32 %v479, 7
        %v481 = vsub.s32 0, %v480
        %v482 = vrot.slane %v438, %v481
        %v483 = vlaneseq
        %v484 = vshrl.u32 %v483, 7
        %v485 = vsub.s32 1, %v484
        %v486 = vrot.slane %v438, %v485
        %v489 = vmul.f32 %v472, %v482
        %v490 = vmul.f32 %v460, %v486
        %v491 = vmul.f32 %v473, %v482
        %v492 = vmul.f32 %v461, %v486
        %v493 = vmul.f32 %v474, %v482
        %v494 = vmul.f32 %v462, %v486
        %v495 = vld [vmem:[%s3] sm:$0xff]
        %v496 = vld [vmem:[%s3 + $0x8] sm:$0xff]
        %v497 = vld [vmem:[%s3 + $0x10] sm:$0xff]
        %499 = vset.pattern.permute.xlu0 0
        %500 = vperm.xlu0 %499, %v495
        %v501 = vpop.permute.xlu0 %500
        %504 = vset.pattern.permute.xlu0 0
        %505 = vperm.xlu0 %504, %v496
        %v506 = vpop.permute.xlu0 %505
        %509 = vset.pattern.permute.xlu0 0
        %510 = vperm.xlu0 %509, %v497
        %v511 = vpop.permute.xlu0 %510
        %v513 = vmul.f32 %v501, %v489
        %v514 = vmul.f32 %v501, %v490
        %v515 = vmul.f32 %v506, %v491
        %v516 = vmul.f32 %v506, %v492
        %v517 = vmul.f32 %v511, %v493
        %v518 = vmul.f32 %v511, %v494
        %v519 = vadd.f32 %v513, 0.0
        %v520 = vadd.f32 %v514, 0.0
        %v521 = vadd.f32 %v515, 0.0
        %v522 = vadd.f32 %v516, 0.0
        %v523 = vadd.f32 %v517, 0.0
        %v524 = vadd.f32 %v518, 0.0
        %525 = vset.pattern.permute.xlu0 1
        %526 = vperm.xlu0 %525, %v495
        %v527 = vpop.permute.xlu0 %526
        %529 = vset.pattern.permute.xlu0 1
        %530 = vperm.xlu0 %529, %v496
        %v531 = vpop.permute.xlu0 %530
        %533 = vset.pattern.permute.xlu0 1
        %534 = vperm.xlu0 %533, %v497
        %v535 = vpop.permute.xlu0 %534
        %v537 = vmul.f32 %v527, %v472
        %v538 = vmul.f32 %v527, %v460
        %v539 = vmul.f32 %v527, %v475
        %v540 = vmul.f32 %v531, %v473
        %v541 = vmul.f32 %v531, %v461
        %v542 = vmul.f32 %v531, %v476
        %v543 = vmul.f32 %v535, %v474
        %v544 = vmul.f32 %v535, %v462
        %v545 = vmul.f32 %v535, %v477
        %555 = vrot.lane.b32.xlu0 %v537, 127
        %v556 = vpop.permute.xlu0 %555
        %557 = vrot.lane.b32.xlu0 %v538, 127
        %v558 = vpop.permute.xlu0 %557
        %559 = vrot.lane.b32.xlu0 %v539, 127
        %v560 = vpop.permute.xlu0 %559
        %561 = vrot.lane.b32.xlu0 %v540, 127
        %v562 = vpop.permute.xlu0 %561
        %563 = vrot.lane.b32.xlu0 %v541, 127
        %v564 = vpop.permute.xlu0 %563
        %565 = vrot.lane.b32.xlu0 %v542, 127
        %v566 = vpop.permute.xlu0 %565
        %567 = vrot.lane.b32.xlu0 %v543, 127
        %v568 = vpop.permute.xlu0 %567
        %569 = vrot.lane.b32.xlu0 %v544, 127
        %v570 = vpop.permute.xlu0 %569
        %571 = vrot.lane.b32.xlu0 %v545, 127
        %v572 = vpop.permute.xlu0 %571
        %vm573 = vcmask 1039360
        %v574 = vsel %vm573, %v556, %v558
        %v575 = vsel %vm573, %v558, %v560
        %v576 = vsel %vm573, %v562, %v564
        %v577 = vsel %vm573, %v564, %v566
        %v578 = vsel %vm573, %v568, %v570
        %v579 = vsel %vm573, %v570, %v572
        %v586 = vadd.f32 %v519, %v574
        %v587 = vadd.f32 %v520, %v575
        %v588 = vadd.f32 %v521, %v576
        %v589 = vadd.f32 %v522, %v577
        %v590 = vadd.f32 %v523, %v578
        %v591 = vadd.f32 %v524, %v579
        %v593 = vlaneseq
        %v594 = vshrl.u32 %v593, 7
        %v595 = vsub.s32 0, %v594
        %v596 = vrot.slane %v440, %v595
        %v597 = vlaneseq
        %v598 = vshrl.u32 %v597, 7
        %v599 = vsub.s32 1, %v598
        %v600 = vrot.slane %v440, %v599
        %601 = vrot.lane.b32.xlu0 %v596, 2
        %v602 = vpop.permute.xlu0 %601
        %603 = vrot.lane.b32.xlu0 %v600, 2
        %v604 = vpop.permute.xlu0 %603
        %vm605 = vcmask 15360
        %v606 = vsel %vm605, %v602, %v604
        %v610 = vmul.f32 %v472, %v602
        %v611 = vmul.f32 %v460, %v606
        %v612 = vmul.f32 %v475, %v604
        %v613 = vmul.f32 %v473, %v602
        %v614 = vmul.f32 %v461, %v606
        %v615 = vmul.f32 %v476, %v604
        %v616 = vmul.f32 %v474, %v602
        %v617 = vmul.f32 %v462, %v606
        %v618 = vmul.f32 %v477, %v604
        %619 = vset.pattern.permute.xlu0 2
        %620 = vperm.xlu0 %619, %v495
        %v621 = vpop.permute.xlu0 %620
        %623 = vset.pattern.permute.xlu0 2
        %624 = vperm.xlu0 %623, %v496
        %v625 = vpop.permute.xlu0 %624
        %627 = vset.pattern.permute.xlu0 2
        %628 = vperm.xlu0 %627, %v497
        %v629 = vpop.permute.xlu0 %628
        %v631 = vmul.f32 %v621, %v610
        %v632 = vmul.f32 %v621, %v611
        %v633 = vmul.f32 %v621, %v612
        %v634 = vmul.f32 %v625, %v613
        %v635 = vmul.f32 %v625, %v614
        %v636 = vmul.f32 %v625, %v615
        %v637 = vmul.f32 %v629, %v616
        %v638 = vmul.f32 %v629, %v617
        %v639 = vmul.f32 %v629, %v618
        %649 = vrot.lane.b32.xlu0 %v631, 126
        %v650 = vpop.permute.xlu0 %649
        %651 = vrot.lane.b32.xlu0 %v632, 126
        %v652 = vpop.permute.xlu0 %651
        %653 = vrot.lane.b32.xlu0 %v633, 126
        %v654 = vpop.permute.xlu0 %653
        %655 = vrot.lane.b32.xlu0 %v634, 126
        %v656 = vpop.permute.xlu0 %655
        %657 = vrot.lane.b32.xlu0 %v635, 126
        %v658 = vpop.permute.xlu0 %657
        %659 = vrot.lane.b32.xlu0 %v636, 126
        %v660 = vpop.permute.xlu0 %659
        %661 = vrot.lane.b32.xlu0 %v637, 126
        %v662 = vpop.permute.xlu0 %661
        %663 = vrot.lane.b32.xlu0 %v638, 126
        %v664 = vpop.permute.xlu0 %663
        %665 = vrot.lane.b32.xlu0 %v639, 126
        %v666 = vpop.permute.xlu0 %665
        %vm667 = vcmask 1031168
        %v668 = vsel %vm667, %v650, %v652
        %v669 = vsel %vm667, %v652, %v654
        %v670 = vsel %vm667, %v656, %v658
        %v671 = vsel %vm667, %v658, %v660
        %v672 = vsel %vm667, %v662, %v664
        %v673 = vsel %vm667, %v664, %v666
        %v680 = vadd.f32 %v586, %v668
        %v681 = vadd.f32 %v587, %v669
        %v682 = vadd.f32 %v588, %v670
        %v683 = vadd.f32 %v589, %v671
        %v684 = vadd.f32 %v590, %v672
        %v685 = vadd.f32 %v591, %v673
        %686 = vrot.lane.b32.xlu0 %v482, 16
        %v687 = vpop.permute.xlu0 %686
        %688 = vrot.lane.b32.xlu0 %v486, 16
        %v689 = vpop.permute.xlu0 %688
        %vm690 = vcmask 130048
        %v691 = vsel %vm690, %v687, %v689
        %v695 = vmul.f32 %v472, %v687
        %v696 = vmul.f32 %v460, %v691
        %v697 = vmul.f32 %v475, %v689
        %v698 = vmul.f32 %v473, %v687
        %v699 = vmul.f32 %v461, %v691
        %v700 = vmul.f32 %v476, %v689
        %v701 = vmul.f32 %v474, %v687
        %v702 = vmul.f32 %v462, %v691
        %v703 = vmul.f32 %v477, %v689
        %704 = vset.pattern.permute.xlu0 3
        %705 = vperm.xlu0 %704, %v495
        %v706 = vpop.permute.xlu0 %705
        %708 = vset.pattern.permute.xlu0 3
        %709 = vperm.xlu0 %708, %v496
        %v710 = vpop.permute.xlu0 %709
        %712 = vset.pattern.permute.xlu0 3
        %713 = vperm.xlu0 %712, %v497
        %v714 = vpop.permute.xlu0 %713
        %v716 = vmul.f32 %v706, %v695
        %v717 = vmul.f32 %v706, %v696
        %v718 = vmul.f32 %v706, %v697
        %v719 = vmul.f32 %v710, %v698
        %v720 = vmul.f32 %v710, %v699
        %v721 = vmul.f32 %v710, %v700
        %v722 = vmul.f32 %v714, %v701
        %v723 = vmul.f32 %v714, %v702
        %v724 = vmul.f32 %v714, %v703
        %734 = vrot.lane.b32.xlu0 %v716, 112
        %v735 = vpop.permute.xlu0 %734
        %736 = vrot.lane.b32.xlu0 %v717, 112
        %v737 = vpop.permute.xlu0 %736
        %738 = vrot.lane.b32.xlu0 %v718, 112
        %v739 = vpop.permute.xlu0 %738
        %740 = vrot.lane.b32.xlu0 %v719, 112
        %v741 = vpop.permute.xlu0 %740
        %742 = vrot.lane.b32.xlu0 %v720, 112
        %v743 = vpop.permute.xlu0 %742
        %744 = vrot.lane.b32.xlu0 %v721, 112
        %v745 = vpop.permute.xlu0 %744
        %746 = vrot.lane.b32.xlu0 %v722, 112
        %v747 = vpop.permute.xlu0 %746
        %748 = vrot.lane.b32.xlu0 %v723, 112
        %v749 = vpop.permute.xlu0 %748
        %750 = vrot.lane.b32.xlu0 %v724, 112
        %v751 = vpop.permute.xlu0 %750
        %vm752 = vcmask 916480
        %v753 = vsel %vm752, %v735, %v737
        %v754 = vsel %vm752, %v737, %v739
        %v755 = vsel %vm752, %v741, %v743
        %v756 = vsel %vm752, %v743, %v745
        %v757 = vsel %vm752, %v747, %v749
        %v758 = vsel %vm752, %v749, %v751
        %v765 = vadd.f32 %v680, %v753
        %v766 = vadd.f32 %v681, %v754
        %v767 = vadd.f32 %v682, %v755
        %v768 = vadd.f32 %v683, %v756
        %v769 = vadd.f32 %v684, %v757
        %v770 = vadd.f32 %v685, %v758
        %771 = vset.pattern.permute.xlu0 4
        %772 = vperm.xlu0 %771, %v495
        %v773 = vpop.permute.xlu0 %772
        %775 = vset.pattern.permute.xlu0 4
        %776 = vperm.xlu0 %775, %v496
        %v777 = vpop.permute.xlu0 %776
        %779 = vset.pattern.permute.xlu0 4
        %780 = vperm.xlu0 %779, %v497
        %v781 = vpop.permute.xlu0 %780
        %v783 = vmul.f32 %v773, %v472
        %v784 = vmul.f32 %v773, %v460
        %v785 = vmul.f32 %v773, %v475
        %v786 = vmul.f32 %v777, %v473
        %v787 = vmul.f32 %v777, %v461
        %v788 = vmul.f32 %v777, %v476
        %v789 = vmul.f32 %v781, %v474
        %v790 = vmul.f32 %v781, %v462
        %v791 = vmul.f32 %v781, %v477
        %801 = vrot.lane.b32.xlu0 %v783, 111
        %v802 = vpop.permute.xlu0 %801
        %803 = vrot.lane.b32.xlu0 %v784, 111
        %v804 = vpop.permute.xlu0 %803
        %805 = vrot.lane.b32.xlu0 %v785, 111
        %v806 = vpop.permute.xlu0 %805
        %807 = vrot.lane.b32.xlu0 %v786, 111
        %v808 = vpop.permute.xlu0 %807
        %809 = vrot.lane.b32.xlu0 %v787, 111
        %v810 = vpop.permute.xlu0 %809
        %811 = vrot.lane.b32.xlu0 %v788, 111
        %v812 = vpop.permute.xlu0 %811
        %813 = vrot.lane.b32.xlu0 %v789, 111
        %v814 = vpop.permute.xlu0 %813
        %815 = vrot.lane.b32.xlu0 %v790, 111
        %v816 = vpop.permute.xlu0 %815
        %817 = vrot.lane.b32.xlu0 %v791, 111
        %v818 = vpop.permute.xlu0 %817
        %vm819 = vcmask 908288
        %v820 = vsel %vm819, %v802, %v804
        %v821 = vsel %vm819, %v804, %v806
        %v822 = vsel %vm819, %v808, %v810
        %v823 = vsel %vm819, %v810, %v812
        %v824 = vsel %vm819, %v814, %v816
        %v825 = vsel %vm819, %v816, %v818
        %v832 = vadd.f32 %v765, %v820
        %v833 = vadd.f32 %v766, %v821
        %v834 = vadd.f32 %v767, %v822
        %v835 = vadd.f32 %v768, %v823
        %v836 = vadd.f32 %v769, %v824
        %v837 = vadd.f32 %v770, %v825
        %838 = vrot.lane.b32.xlu0 %v596, 18
        %v839 = vpop.permute.xlu0 %838
        %840 = vrot.lane.b32.xlu0 %v600, 18
        %v841 = vpop.permute.xlu0 %840
        %vm842 = vcmask 146432
        %v843 = vsel %vm842, %v839, %v841
        %v847 = vmul.f32 %v472, %v839
        %v848 = vmul.f32 %v460, %v843
        %v849 = vmul.f32 %v475, %v841
        %v850 = vmul.f32 %v473, %v839
        %v851 = vmul.f32 %v461, %v843
        %v852 = vmul.f32 %v476, %v841
        %v853 = vmul.f32 %v474, %v839
        %v854 = vmul.f32 %v462, %v843
        %v855 = vmul.f32 %v477, %v841
        %856 = vset.pattern.permute.xlu0 5
        %857 = vperm.xlu0 %856, %v495
        %v858 = vpop.permute.xlu0 %857
        %860 = vset.pattern.permute.xlu0 5
        %861 = vperm.xlu0 %860, %v496
        %v862 = vpop.permute.xlu0 %861
        %864 = vset.pattern.permute.xlu0 5
        %865 = vperm.xlu0 %864, %v497
        %v866 = vpop.permute.xlu0 %865
        %v868 = vmul.f32 %v858, %v847
        %v869 = vmul.f32 %v858, %v848
        %v870 = vmul.f32 %v858, %v849
        %v871 = vmul.f32 %v862, %v850
        %v872 = vmul.f32 %v862, %v851
        %v873 = vmul.f32 %v862, %v852
        %v874 = vmul.f32 %v866, %v853
        %v875 = vmul.f32 %v866, %v854
        %v876 = vmul.f32 %v866, %v855
        %886 = vrot.lane.b32.xlu0 %v868, 110
        %v887 = vpop.permute.xlu0 %886
        %888 = vrot.lane.b32.xlu0 %v869, 110
        %v889 = vpop.permute.xlu0 %888
        %890 = vrot.lane.b32.xlu0 %v870, 110
        %v891 = vpop.permute.xlu0 %890
        %892 = vrot.lane.b32.xlu0 %v871, 110
        %v893 = vpop.permute.xlu0 %892
        %894 = vrot.lane.b32.xlu0 %v872, 110
        %v895 = vpop.permute.xlu0 %894
        %896 = vrot.lane.b32.xlu0 %v873, 110
        %v897 = vpop.permute.xlu0 %896
        %898 = vrot.lane.b32.xlu0 %v874, 110
        %v899 = vpop.permute.xlu0 %898
        %900 = vrot.lane.b32.xlu0 %v875, 110
        %v901 = vpop.permute.xlu0 %900
        %902 = vrot.lane.b32.xlu0 %v876, 110
        %v903 = vpop.permute.xlu0 %902
        %vm904 = vcmask 900096
        %v905 = vsel %vm904, %v887, %v889
        %v906 = vsel %vm904, %v889, %v891
        %v907 = vsel %vm904, %v893, %v895
        %v908 = vsel %vm904, %v895, %v897
        %v909 = vsel %vm904, %v899, %v901
        %v910 = vsel %vm904, %v901, %v903
        %v917 = vadd.f32 %v832, %v905
        %v918 = vadd.f32 %v833, %v906
        %v919 = vadd.f32 %v834, %v907
        %v920 = vadd.f32 %v835, %v908
        %v921 = vadd.f32 %v836, %v909
        %v922 = vadd.f32 %v837, %v910
        %923 = vrot.lane.b32.xlu0 %v482, 32
        %v924 = vpop.permute.xlu0 %923
        %925 = vrot.lane.b32.xlu0 %v486, 32
        %v926 = vpop.permute.xlu0 %925
        %vm927 = vcmask 261120
        %v928 = vsel %vm927, %v924, %v926
        %v932 = vmul.f32 %v472, %v924
        %v933 = vmul.f32 %v460, %v928
        %v934 = vmul.f32 %v475, %v926
        %v935 = vmul.f32 %v473, %v924
        %v936 = vmul.f32 %v461, %v928
        %v937 = vmul.f32 %v476, %v926
        %v938 = vmul.f32 %v474, %v924
        %v939 = vmul.f32 %v462, %v928
        %v940 = vmul.f32 %v477, %v926
        %941 = vset.pattern.permute.xlu0 6
        %942 = vperm.xlu0 %941, %v495
        %v943 = vpop.permute.xlu0 %942
        %945 = vset.pattern.permute.xlu0 6
        %946 = vperm.xlu0 %945, %v496
        %v947 = vpop.permute.xlu0 %946
        %949 = vset.pattern.permute.xlu0 6
        %950 = vperm.xlu0 %949, %v497
        %v951 = vpop.permute.xlu0 %950
        %v953 = vmul.f32 %v943, %v932
        %v954 = vmul.f32 %v943, %v933
        %v955 = vmul.f32 %v943, %v934
        %v956 = vmul.f32 %v947, %v935
        %v957 = vmul.f32 %v947, %v936
        %v958 = vmul.f32 %v947, %v937
        %v959 = vmul.f32 %v951, %v938
        %v960 = vmul.f32 %v951, %v939
        %v961 = vmul.f32 %v951, %v940
        %971 = vrot.lane.b32.xlu0 %v953, 96
        %v972 = vpop.permute.xlu0 %971
        %973 = vrot.lane.b32.xlu0 %v954, 96
        %v974 = vpop.permute.xlu0 %973
        %975 = vrot.lane.b32.xlu0 %v955, 96
        %v976 = vpop.permute.xlu0 %975
        %977 = vrot.lane.b32.xlu0 %v956, 96
        %v978 = vpop.permute.xlu0 %977
        %979 = vrot.lane.b32.xlu0 %v957, 96
        %v980 = vpop.permute.xlu0 %979
        %981 = vrot.lane.b32.xlu0 %v958, 96
        %v982 = vpop.permute.xlu0 %981
        %983 = vrot.lane.b32.xlu0 %v959, 96
        %v984 = vpop.permute.xlu0 %983
        %985 = vrot.lane.b32.xlu0 %v960, 96
        %v986 = vpop.permute.xlu0 %985
        %987 = vrot.lane.b32.xlu0 %v961, 96
        %v988 = vpop.permute.xlu0 %987
        %vm989 = vcmask 785408
        %v990 = vsel %vm989, %v972, %v974
        %v991 = vsel %vm989, %v974, %v976
        %v992 = vsel %vm989, %v978, %v980
        %v993 = vsel %vm989, %v980, %v982
        %v994 = vsel %vm989, %v984, %v986
        %v995 = vsel %vm989, %v986, %v988
        %v1002 = vadd.f32 %v917, %v990
        %v1003 = vadd.f32 %v918, %v991
        %v1004 = vadd.f32 %v919, %v992
        %v1005 = vadd.f32 %v920, %v993
        %v1006 = vadd.f32 %v921, %v994
        %v1007 = vadd.f32 %v922, %v995
        %1008 = vset.pattern.permute.xlu0 7
        %1009 = vperm.xlu0 %1008, %v495
        %v1010 = vpop.permute.xlu0 %1009
        %1012 = vset.pattern.permute.xlu0 7
        %1013 = vperm.xlu0 %1012, %v496
        %v1014 = vpop.permute.xlu0 %1013
        %1016 = vset.pattern.permute.xlu0 7
        %1017 = vperm.xlu0 %1016, %v497
        %v1018 = vpop.permute.xlu0 %1017
        %v1020 = vmul.f32 %v1010, %v472
        %v1021 = vmul.f32 %v1010, %v460
        %v1022 = vmul.f32 %v1010, %v475
        %v1023 = vmul.f32 %v1014, %v473
        %v1024 = vmul.f32 %v1014, %v461
        %v1025 = vmul.f32 %v1014, %v476
        %v1026 = vmul.f32 %v1018, %v474
        %v1027 = vmul.f32 %v1018, %v462
        %v1028 = vmul.f32 %v1018, %v477
        %1038 = vrot.lane.b32.xlu0 %v1020, 95
        %v1039 = vpop.permute.xlu0 %1038
        %1040 = vrot.lane.b32.xlu0 %v1021, 95
        %v1041 = vpop.permute.xlu0 %1040
        %1042 = vrot.lane.b32.xlu0 %v1022, 95
        %v1043 = vpop.permute.xlu0 %1042
        %1044 = vrot.lane.b32.xlu0 %v1023, 95
        %v1045 = vpop.permute.xlu0 %1044
        %1046 = vrot.lane.b32.xlu0 %v1024, 95
        %v1047 = vpop.permute.xlu0 %1046
        %1048 = vrot.lane.b32.xlu0 %v1025, 95
        %v1049 = vpop.permute.xlu0 %1048
        %1050 = vrot.lane.b32.xlu0 %v1026, 95
        %v1051 = vpop.permute.xlu0 %1050
        %1052 = vrot.lane.b32.xlu0 %v1027, 95
        %v1053 = vpop.permute.xlu0 %1052
        %1054 = vrot.lane.b32.xlu0 %v1028, 95
        %v1055 = vpop.permute.xlu0 %1054
        %vm1056 = vcmask 777216
        %v1057 = vsel %vm1056, %v1039, %v1041
        %v1058 = vsel %vm1056, %v1041, %v1043
        %v1059 = vsel %vm1056, %v1045, %v1047
        %v1060 = vsel %vm1056, %v1047, %v1049
        %v1061 = vsel %vm1056, %v1051, %v1053
        %v1062 = vsel %vm1056, %v1053, %v1055
        %v1069 = vadd.f32 %v1002, %v1057
        %v1070 = vadd.f32 %v1003, %v1058
        %v1071 = vadd.f32 %v1004, %v1059
        %v1072 = vadd.f32 %v1005, %v1060
        %v1073 = vadd.f32 %v1006, %v1061
        %v1074 = vadd.f32 %v1007, %v1062
        %1075 = vrot.lane.b32.xlu0 %v596, 34
        %v1076 = vpop.permute.xlu0 %1075
        %1077 = vrot.lane.b32.xlu0 %v600, 34
        %v1078 = vpop.permute.xlu0 %1077
        %vm1079 = vcmask 277504
        %v1080 = vsel %vm1079, %v1076, %v1078
        %v1084 = vmul.f32 %v472, %v1076
        %v1085 = vmul.f32 %v460, %v1080
        %v1086 = vmul.f32 %v475, %v1078
        %v1087 = vmul.f32 %v473, %v1076
        %v1088 = vmul.f32 %v461, %v1080
        %v1089 = vmul.f32 %v476, %v1078
        %v1090 = vmul.f32 %v474, %v1076
        %v1091 = vmul.f32 %v462, %v1080
        %v1092 = vmul.f32 %v477, %v1078
        %1093 = vset.pattern.permute.xlu0 8
        %1094 = vperm.xlu0 %1093, %v495
        %v1095 = vpop.permute.xlu0 %1094
        %1097 = vset.pattern.permute.xlu0 8
        %1098 = vperm.xlu0 %1097, %v496
        %v1099 = vpop.permute.xlu0 %1098
        %1101 = vset.pattern.permute.xlu0 8
        %1102 = vperm.xlu0 %1101, %v497
        %v1103 = vpop.permute.xlu0 %1102
        %v1105 = vmul.f32 %v1095, %v1084
        %v1106 = vmul.f32 %v1095, %v1085
        %v1107 = vmul.f32 %v1095, %v1086
        %v1108 = vmul.f32 %v1099, %v1087
        %v1109 = vmul.f32 %v1099, %v1088
        %v1110 = vmul.f32 %v1099, %v1089
        %v1111 = vmul.f32 %v1103, %v1090
        %v1112 = vmul.f32 %v1103, %v1091
        %v1113 = vmul.f32 %v1103, %v1092
        %1123 = vrot.lane.b32.xlu0 %v1105, 94
        %v1124 = vpop.permute.xlu0 %1123
        %1125 = vrot.lane.b32.xlu0 %v1106, 94
        %v1126 = vpop.permute.xlu0 %1125
        %1127 = vrot.lane.b32.xlu0 %v1107, 94
        %v1128 = vpop.permute.xlu0 %1127
        %1129 = vrot.lane.b32.xlu0 %v1108, 94
        %v1130 = vpop.permute.xlu0 %1129
        %1131 = vrot.lane.b32.xlu0 %v1109, 94
        %v1132 = vpop.permute.xlu0 %1131
        %1133 = vrot.lane.b32.xlu0 %v1110, 94
        %v1134 = vpop.permute.xlu0 %1133
        %1135 = vrot.lane.b32.xlu0 %v1111, 94
        %v1136 = vpop.permute.xlu0 %1135
        %1137 = vrot.lane.b32.xlu0 %v1112, 94
        %v1138 = vpop.permute.xlu0 %1137
        %1139 = vrot.lane.b32.xlu0 %v1113, 94
        %v1140 = vpop.permute.xlu0 %1139
        %vm1141 = vcmask 769024
        %v1142 = vsel %vm1141, %v1124, %v1126
        %v1143 = vsel %vm1141, %v1126, %v1128
        %v1144 = vsel %vm1141, %v1130, %v1132
        %v1145 = vsel %vm1141, %v1132, %v1134
        %v1146 = vsel %vm1141, %v1136, %v1138
        %v1147 = vsel %vm1141, %v1138, %v1140
        %v1154 = vadd.f32 %v1069, %v1142
        %v1155 = vadd.f32 %v1070, %v1143
        %v1156 = vadd.f32 %v1071, %v1144
        %v1157 = vadd.f32 %v1072, %v1145
        %v1158 = vadd.f32 %v1073, %v1146
        %v1159 = vadd.f32 %v1074, %v1147
        %v1160 = vld [vmem:[%s6] sm:$0xff]
        %v1161 = vld [vmem:[%s6 + $0x8] sm:$0xff]
        %v1162 = vld [vmem:[%s6 + $0x10] sm:$0xff]
        %v1163 = vld [vmem:[%s6 + $0x18] sm:$0xff]
        %v1164 = vld [vmem:[%s6 + $0x20] sm:$0xff]
        %v1165 = vld [vmem:[%s6 + $0x28] sm:$0xff]
        %v1166 = vld [vmem:[%s6 + $0x30] sm:$0xff]
        %v1167 = vld [vmem:[%s6 + $0x38] sm:$0xff]
        %v1168 = vld [vmem:[%s6 + $0x40] sm:$0xff]
        %v1169 = vld [vmem:[%s6 + $0x48] sm:$0xff]
        %v1170 = vld [vmem:[%s6 + $0x50] sm:$0xff]
        %v1171 = vld [vmem:[%s6 + $0x58] sm:$0xff]
        %v1172 = vld [vmem:[%s6 + $0x60] sm:$0xff]
        %v1173 = vld [vmem:[%s6 + $0x68] sm:$0xff]
        %v1174 = vld [vmem:[%s6 + $0x70] sm:$0xff]
        %v1175 = vld [vmem:[%s6 + $0x78] sm:$0xff]
        %v1176 = vld [vmem:[%s6 + $0x80] sm:$0xff]
        %v1177 = vld [vmem:[%s6 + $0x88] sm:$0xff]
        %v1178 = vld [vmem:[%s6 + $0x90] sm:$0xff]
        %v1179 = vld [vmem:[%s6 + $0x98] sm:$0xff]
        %v1180 = vld [vmem:[%s6 + $0xa0] sm:$0xff]
        %v1181 = vld [vmem:[%s6 + $0xa8] sm:$0xff]
        %v1182 = vld [vmem:[%s6 + $0xb0] sm:$0xff]
        %v1183 = vld [vmem:[%s6 + $0xb8] sm:$0xff]
        %v1184 = vld [vmem:[%s6 + $0xc0] sm:$0xff]
        %v1185 = vld [vmem:[%s6 + $0xc8] sm:$0xff]
        %v1186 = vld [vmem:[%s6 + $0xd0] sm:$0xff]
        %v1187 = vld [vmem:[%s6 + $0xd8] sm:$0xff]
        %v1188 = vld [vmem:[%s6 + $0xe0] sm:$0xff]
        %v1189 = vld [vmem:[%s6 + $0xe8] sm:$0xff]
        %v1190 = vld [vmem:[%s6 + $0xf0] sm:$0xff]
        %v1191 = vld [vmem:[%s6 + $0xf8] sm:$0xff]
        %v1192 = vld [vmem:[%s5] sm:$0xff]
        %v1193 = vld [vmem:[%s5 + $0x8] sm:$0xff]
        %v1194 = vld [vmem:[%s5 + $0x10] sm:$0xff]
        %1196 = vset.pattern.permute.xlu0 0
        %1197 = vperm.xlu0 %1196, %v1192
        %v1198 = vpop.permute.xlu0 %1197
        %1201 = vset.pattern.permute.xlu0 0
        %1202 = vperm.xlu0 %1201, %v1193
        %v1203 = vpop.permute.xlu0 %1202
        %1206 = vset.pattern.permute.xlu0 0
        %1207 = vperm.xlu0 %1206, %v1194
        %v1208 = vpop.permute.xlu0 %1207
        %1210 = vmatprep.subr.mxu0 0.0
        %1211 = vmatpush1.msra.mxu0 %v1160
        %1212 = vmatprep.subr.mxu0 0.0
        %1213 = vmatpush1.msra.mxu0 %v1161
        %1214 = vmatprep.subr.mxu0 0.0
        %1215 = vmatpush1.msra.mxu0 %v1162
        %1216 = vmatprep.subr.mxu0 0.0
        %1217 = vmatpush1.msra.mxu0 %v1163
        %1218 = vmatprep.subr.mxu0 0.0
        %1219 = vmatpush1.msra.mxu0 %v1164
        %1220 = vmatprep.subr.mxu0 0.0
        %1221 = vmatpush1.msra.mxu0 %v1165
        %1222 = vmatprep.subr.mxu0 0.0
        %1223 = vmatpush1.msra.mxu0 %v1166
        %1224 = vmatprep.subr.mxu0 0.0
        %1225 = vmatpush1.msra.mxu0 %v1167
        %1226 = vmatprep.subr.mxu0 0.0
        %1227 = vmatpush1.msra.mxu0 %v1168
        %1228 = vmatprep.subr.mxu0 0.0
        %1229 = vmatpush1.msra.mxu0 %v1169
        %1230 = vmatprep.subr.mxu0 0.0
        %1231 = vmatpush1.msra.mxu0 %v1170
        %1232 = vmatprep.subr.mxu0 0.0
        %1233 = vmatpush1.msra.mxu0 %v1171
        %1234 = vmatprep.subr.mxu0 0.0
        %1235 = vmatpush1.msra.mxu0 %v1172
        %1236 = vmatprep.subr.mxu0 0.0
        %1237 = vmatpush1.msra.mxu0 %v1173
        %1238 = vmatprep.subr.mxu0 0.0
        %1239 = vmatpush1.msra.mxu0 %v1174
        %1240 = vmatprep.subr.mxu0 0.0
        %1241 = vmatpush1.msra.mxu0 %v1175
        %1242 = vmatprep.subr.mxu0 0.0
        %1243 = vmatpush1.msra.mxu0 %v1176
        %1244 = vmatprep.subr.mxu0 0.0
        %1245 = vmatpush1.msra.mxu0 %v1177
        %1246 = vmatprep.subr.mxu0 0.0
        %1247 = vmatpush1.msra.mxu0 %v1178
        %1248 = vmatprep.subr.mxu0 0.0
        %1249 = vmatpush1.msra.mxu0 %v1179
        %1250 = vmatprep.subr.mxu0 0.0
        %1251 = vmatpush1.msra.mxu0 %v1180
        %1252 = vmatprep.subr.mxu0 0.0
        %1253 = vmatpush1.msra.mxu0 %v1181
        %1254 = vmatprep.subr.mxu0 0.0
        %1255 = vmatpush1.msra.mxu0 %v1182
        %1256 = vmatprep.subr.mxu0 0.0
        %1257 = vmatpush1.msra.mxu0 %v1183
        %1258 = vmatprep.subr.mxu0 0.0
        %1259 = vmatpush1.msra.mxu0 %v1184
        %1260 = vmatprep.subr.mxu0 0.0
        %1261 = vmatpush1.msra.mxu0 %v1185
        %1262 = vmatprep.subr.mxu0 0.0
        %1263 = vmatpush1.msra.mxu0 %v1186
        %1264 = vmatprep.subr.mxu0 0.0
        %1265 = vmatpush1.msra.mxu0 %v1187
        %1266 = vmatprep.subr.mxu0 0.0
        %1267 = vmatpush1.msra.mxu0 %v1188
        %1268 = vmatprep.subr.mxu0 0.0
        %1269 = vmatpush1.msra.mxu0 %v1189
        %1270 = vmatprep.subr.mxu0 0.0
        %1271 = vmatpush1.msra.mxu0 %v1190
        %1272 = vmatprep.subr.mxu0 0.0
        %1273 = vmatpush1.msra.mxu0 %v1191
        %1274 = vmatprep.mubr.f32.mxu0 %v1155
        %1275 = vmatmul.mubr.f32.gmra.mrb[0].mxu0 %v1154
        %v1276 = vpop.f32.mrb[0].mxu0
        %v1277 = vadd.f32 %v1198, %v1276
        %v1278 = vpop.f32.mrb[0].mxu0
        %1279 = vmatprep.mubr.f32.mxu0 %v1157
        %1280 = vmatmul.mubr.f32.gmra.mrb[0].mxu0 %v1156
        %v1281 = vpop.f32.mrb[0].mxu0
        %v1282 = vadd.f32 %v1203, %v1281
        %v1283 = vpop.f32.mrb[0].mxu0
        %1284 = vmatprep.mubr.f32.mxu0 %v1159
        %1285 = vmatmul.mubr.f32.gmra.mrb[0].mxu0 %v1158
        %v1286 = vpop.f32.mrb[0].mxu0
        %v1287 = vadd.f32 %v1208, %v1286
        %v1288 = vpop.f32.mrb[0].mxu0
        %1289 = vdwg.mxu0
        %v1290 = vmax.f32 %v1277, 0.0
        %v1291 = vmax.f32 %v1282, 0.0
        %v1292 = vmax.f32 %v1287, 0.0
        %v1293 = vld [vmem:[%s7] sm:$0xf]
        %v1294 = vpack.c.bf16 %v1291, %v1290
        %v1295 = vpack.c.bf16 %v1292, %v1292
        %v1296 = vld [vmem:[%s8] sm:$0xff]
        %1298 = vset.pattern.permute.xlu0 0
        %1299 = vperm.xlu0 %1298, %v1296
        %v1300 = vpop.permute.xlu0 %1299
        %vm1302 = vcmask 195584
        %v1304 = vsel %vm1302, %v1293, 0
        %vm1306 = vcmask 1043456
        %v1308 = vsel %vm1306, %v1295, 0
        %1310 = vmatprep.subr.bf16.mxu0 0
        %1311 = vmatpush1.bf16.msra.mxu0 %v1294
        %1312 = vmatprep.subr.bf16.mxu0 0
        %1313 = vmatpush1.bf16.msra.mxu0 %v1308
        %1314 = vmatprep.subr.bf16.mxu0 0
        %1315 = vmatpush1.bf16.msra.mxu0 0
        %1316 = vmatprep.subr.bf16.mxu0 0
        %1317 = vmatpush1.bf16.msra.mxu0 0
        %1318 = vmatprep.subr.bf16.mxu0 0
        %1319 = vmatpush1.bf16.msra.mxu0 0
        %1320 = vmatprep.subr.bf16.mxu0 0
        %1321 = vmatpush1.bf16.msra.mxu0 0
        %1322 = vmatprep.subr.bf16.mxu0 0
        %1323 = vmatpush1.bf16.msra.mxu0 0
        %1324 = vmatprep.subr.bf16.mxu0 0
        %1325 = vmatpush1.bf16.msra.mxu0 0
        %1326 = vmatprep.subr.bf16.mxu0 0
        %1327 = vmatpush1.bf16.msra.mxu0 0
        %1328 = vmatprep.subr.bf16.mxu0 0
        %1329 = vmatpush1.bf16.msra.mxu0 0
        %1330 = vmatprep.subr.bf16.mxu0 0
        %1331 = vmatpush1.bf16.msra.mxu0 0
        %1332 = vmatprep.subr.bf16.mxu0 0
        %1333 = vmatpush1.bf16.msra.mxu0 0
        %1334 = vmatprep.subr.bf16.mxu0 0
        %1335 = vmatpush1.bf16.msra.mxu0 0
        %1336 = vmatprep.subr.bf16.mxu0 0
        %1337 = vmatpush1.bf16.msra.mxu0 0
        %1338 = vmatprep.subr.bf16.mxu0 0
        %1339 = vmatpush1.bf16.msra.mxu0 0
        %1340 = vmatprep.subr.bf16.mxu0 0
        %1341 = vmatpush1.bf16.msra.mxu0 0
        %1342 = vmatprep.mubr.bf16.mxu0 0
        %1343 = vmatmul.mubr.bf16.gmra.mrb[0].mxu0 %v1304
        %v1344 = vpop.f32.mrb[0].mxu0
        %v1345 = vadd.f32 %v1300, %v1344
        %v1346 = vpop.f32.mrb[0].mxu0
        %v1347 = vpop.f32.mrb[0].mxu0
        %v1348 = vpop.f32.mrb[0].mxu0
        %1349 = vdwg.mxu0
        %vm1350 = vcmask 523264
        %1351 = vst.msk [vmem:[%s325] sm:$0xff] %vm1350, %v1345
        %s1352 = sand.u32 %s225, 1
        %s1353 = scalar_lea.sflag [#allocation3], %s1352
        %s1354 = sand.u32 %s225, 1
        %s1355 = smul.addr %s1354, 8
        %s1356 = scalar_lea.vmem [#allocation2], %s1355
        // Predicated region
        $region57: #{tpu_custom_call.1} parent=55 // pred_check
          %p1357 = pneg %p235
        $region58: #{tpu_custom_call.1} parent=55 // pred_check_branch
          %1359 = sbr.rel (%p1357) target = $region60
        $region59: #{tpu_custom_call.1} parent=55 // pred_region
          %s1361 = ssub.s32 128, 128
          %1362 = vsyncadd %s1353, %s1361
          %s1363 = smul.addr %s23, 128
          %s1364 = scalar_lea.hbm %s9, %s1363
          %s1366 = sshll.u32 %s1356, 4
          %s1367 = int_to_ptr.vmem [resolvable:$true] %s1366
          %1369 = dma.vmem_to_hbm [thread:$0]  %s1367, 128, %s1364, %s1353
        $region60: #{tpu_custom_call.1} parent=55 // pred_fallthru
          _
      $region56: #{tpu_custom_call.1} parent=5 // pred_fallthru
        _
      %p1370 = scmp.le.s32.totalorder 2, %s18
      // Predicated region
      $region61: #{tpu_custom_call.1} parent=5 // pred_check
        %p1371 = pneg %p1370
      $region62: #{tpu_custom_call.1} parent=5 // pred_check_branch
        %1373 = sbr.rel (%p1371) target = $region64
      $region63: #{tpu_custom_call.1} parent=5 // pred_region
        %s1374 = ssub.s32 %s18, 2
        // Predicated region
        $region65: #{tpu_custom_call.1} parent=63 // pred_check
          %p1375 = pneg %p241
        $region66: #{tpu_custom_call.1} parent=63 // pred_check_branch
          %1377 = sbr.rel (%p1375) target = $region68
        $region67: #{tpu_custom_call.1} parent=63 // pred_region
          %s1378 = sand.u32 %s226, 1
          %s1379 = scalar_lea.sflag [#allocation3], %s1378
          %s1380 = sand.u32 %s226, 1
          %s1381 = smul.addr %s1380, 8
          %s1382 = scalar_lea.vmem [#allocation2], %s1381
          %1383 = dma.done %s1379, 128
        $region68: #{tpu_custom_call.1} parent=63 // pred_fallthru
          _
      $region64: #{tpu_custom_call.1} parent=5 // pred_fallthru
        _
    $region6: #{tpu_custom_call.1} parent=1 // loop_footer
      %s22 = sadd.s32 1, %s18
    $region7: #{tpu_custom_call.1} parent=1 // loop_footer_branch
      %17 = sbr.rel target = $region3
    $region8: #{tpu_custom_call.1} parent=1 // loop_exit
      _
    %1384 = vsyncpa [#allocation3], 1
    %s1385 = scalar_lea.sflag [#allocation3], 1
    %1386 = vsyncpa %s1385, 1

// kernel: tpu_custom_call.1
$region0: #{tpu_custom_call.1}
  #allocation0 [shape = 'u32[]', space=smem, size = 0x4, offset = 0x4, fixed_abs, tag = 'smem constant byte address 0x4 - core index']
  #allocation1 [shape = 'u32[144,128]{1,0:T(1,128)}', space=vmem, size = 0x12000, scoped, tag = 'internal scratch']
  %s0 = inlined_call_operand.vmem [shape: f32[2,4,256], index: 0, kind: input, shape index: {}]
  %s1 = inlined_call_operand.vmem [shape: bf16[24,4], index: 1, kind: input, shape index: {}]
  %s2 = inlined_call_operand.vmem [shape: f32[24,1], index: 2, kind: input, shape index: {}]
  %s3 = inlined_call_operand.vmem [shape: f32[24,9], index: 3, kind: input, shape index: {}]
  %s4 = inlined_call_operand.vmem [shape: f32[3,256], index: 4, kind: input, shape index: {}]
  %s5 = inlined_call_operand.vmem [shape: f32[24,1], index: 5, kind: input, shape index: {}]
  %s6 = inlined_call_operand.vmem [shape: f32[256,64], index: 6, kind: input, shape index: {}]
  %s7 = inlined_call_operand.vmem [shape: bf16[8,24], index: 7, kind: input, shape index: {}]
  %s8 = inlined_call_operand.vmem [shape: f32[8,1], index: 8, kind: input, shape index: {}]
  %s9 = inlined_call_operand.hbm [shape: f32[2,8,64], index: 9, kind: output, shape index: {}]
  %s10 = sld [smem:[#allocation0]]
  $region69: #{tpu_custom_call.1} parent=0
    _
  %s12 = ssub.s32 1, %s10
  %s13 = scalar_select 0, %s12, %s10
  $region1: #{tpu_custom_call.1} parent=0
    #allocation2 [shape = 'u8[8192]{0}', space=vmem, size = 0x2000, scoped, tag = 'output window, operand 0']
    #allocation3 [shape = 's32[2]{0}', space=sflag, size = 0x8, scoped, tag = 'scoped memory for tpu_custom_call.1']
    %14 = vsyncpa [#allocation3], 0
    %s15 = scalar_lea.sflag [#allocation3], 1
    %16 = vsyncpa %s15, 0
    loop: start=0, step=1, limit=4
    $region2: #{tpu_custom_call.1} parent=1 // loop_pre_header
      _
    $region3: #{tpu_custom_call.1} parent=1 // loop_header
      %s18 = sphi 0, %s22
      %p19 = scmp.ge.s32.totalorder %s18, 4
      %s28 = sphi 0, %s30
      %s31 = sphi 0, %s28
      %s32 = sphi 0, %s31
      %s48 = sphi 0, %s32
      %s52 = sphi 0, %s52
      %s54 = sphi 0, %s52
      %s55 = sphi 0, %s54
      %s69 = sphi 0, %s55
      %s73 = sphi 0, %s73
      %s75 = sphi 0, %s73
      %s76 = sphi 0, %s75
      %s90 = sphi 0, %s76
      %s94 = sphi 0, %s94
      %s96 = sphi 0, %s94
      %s97 = sphi 0, %s96
      %s111 = sphi 0, %s97
      %s115 = sphi 0, %s115
      %s117 = sphi 0, %s115
      %s118 = sphi 0, %s117
      %s132 = sphi 0, %s118
      %s136 = sphi 0, %s136
      %s138 = sphi 0, %s136
      %s139 = sphi 0, %s138
      %s153 = sphi 0, %s139
      %s157 = sphi 0, %s157
      %s159 = sphi 0, %s157
      %s160 = sphi 0, %s159
      %s174 = sphi 0, %s160
      %s178 = sphi 0, %s178
      %s180 = sphi 0, %s178
      %s181 = sphi 0, %s180
      %s195 = sphi 0, %s181
      %s199 = sphi 0, %s199
      %s201 = sphi 0, %s199
      %s202 = sphi 0, %s201
      %s216 = sphi 0, %s202
      %s222 = sphi 0, %s224
      %s225 = sphi 0, %s222
      %s226 = sphi 0, %s225
      %s242 = sphi 0, %s226
    $region4: #{tpu_custom_call.1} parent=1 // loop_header_branch
      %21 = sbr.rel (%p19) target = $region8
    $region5: #{tpu_custom_call.1} parent=1 // loop_body
      %s23 = ssub.s32 %s18, 1
      %s24 = ssub.s32 %s18, 2
      %s25 = sadd.s32 %s18, 1
      %s26 = ssub.s32 %s18, %s25
      %p27 = scmp.eq.s32.totalorder %s26, 0
      %s29 = sadd.s32 %s28, 1
      %s30 = scalar_select %p27, %s28, %s29
      %p33 = pneg %p27
      %p34 = scmp.eq.s32.totalorder %s18, 1
      %p35 = por %p33, %p34
      %p36 = scmp.ne.s32.totalorder %s28, %s31
      %p37 = scmp.eq.s32.totalorder %s18, 0
      %p38 = por %p36, %p37
      %p39 = scmp.ne.s32.totalorder %s28, %s31
      %p40 = scmp.eq.s32.totalorder %s23, 1
      %p41 = por %p39, %p40
      %p42 = scmp.ne.s32.totalorder %s31, %s32
      %p43 = scmp.eq.s32.totalorder %s23, 0
      %p44 = por %p42, %p43
      %p45 = scmp.ne.s32.totalorder %s31, %s32
      %p46 = scmp.eq.s32.totalorder %s24, 1
      %p47 = por %p45, %p46
      %p49 = scmp.ne.s32.totalorder %s32, %s48
      %p50 = scmp.eq.s32.totalorder %s24, 0
      %p51 = por %p49, %p50
      %s53 = sadd.s32 %s52, 1
      %p56 = scmp.eq.s32.totalorder %s18, 1
      %p57 = scmp.ne.s32.totalorder %s52, %s54
      %p58 = scmp.eq.s32.totalorder %s18, 0
      %p59 = por %p57, %p58
      %p60 = scmp.ne.s32.totalorder %s52, %s54
      %p61 = scmp.eq.s32.totalorder %s23, 1
      %p62 = por %p60, %p61
      %p63 = scmp.ne.s32.totalorder %s54, %s55
      %p64 = scmp.eq.s32.totalorder %s23, 0
      %p65 = por %p63, %p64
      %p66 = scmp.ne.s32.totalorder %s54, %s55
      %p67 = scmp.eq.s32.totalorder %s24, 1
      %p68 = por %p66, %p67
      %p70 = scmp.ne.s32.totalorder %s55, %s69
      %p71 = scmp.eq.s32.totalorder %s24, 0
      %p72 = por %p70, %p71
      %s74 = sadd.s32 %s73, 1
      %p77 = scmp.eq.s32.totalorder %s18, 1
      %p78 = scmp.ne.s32.totalorder %s73, %s75
      %p79 = scmp.eq.s32.totalorder %s18, 0
      %p80 = por %p78, %p79
      %p81 = scmp.ne.s32.totalorder %s73, %s75
      %p82 = scmp.eq.s32.totalorder %s23, 1
      %p83 = por %p81, %p82
      %p84 = scmp.ne.s32.totalorder %s75, %s76
      %p85 = scmp.eq.s32.totalorder %s23, 0
      %p86 = por %p84, %p85
      %p87 = scmp.ne.s32.totalorder %s75, %s76
      %p88 = scmp.eq.s32.totalorder %s24, 1
      %p89 = por %p87, %p88
      %p91 = scmp.ne.s32.totalorder %s76, %s90
      %p92 = scmp.eq.s32.totalorder %s24, 0
      %p93 = por %p91, %p92
      %s95 = sadd.s32 %s94, 1
      %p98 = scmp.eq.s32.totalorder %s18, 1
      %p99 = scmp.ne.s32.totalorder %s94, %s96
      %p100 = scmp.eq.s32.totalorder %s18, 0
      %p101 = por %p99, %p100
      %p102 = scmp.ne.s32.totalorder %s94, %s96
      %p103 = scmp.eq.s32.totalorder %s23, 1
      %p104 = por %p102, %p103
      %p105 = scmp.ne.s32.totalorder %s96, %s97
      %p106 = scmp.eq.s32.totalorder %s23, 0
      %p107 = por %p105, %p106
      %p108 = scmp.ne.s32.totalorder %s96, %s97
      %p109 = scmp.eq.s32.totalorder %s24, 1
      %p110 = por %p108, %p109
      %p112 = scmp.ne.s32.totalorder %s97, %s111
      %p113 = scmp.eq.s32.totalorder %s24, 0
      %p114 = por %p112, %p113
      %s116 = sadd.s32 %s115, 1
      %p119 = scmp.eq.s32.totalorder %s18, 1
      %p120 = scmp.ne.s32.totalorder %s115, %s117
      %p121 = scmp.eq.s32.totalorder %s18, 0
      %p122 = por %p120, %p121
      %p123 = scmp.ne.s32.totalorder %s115, %s117
      %p124 = scmp.eq.s32.totalorder %s23, 1
      %p125 = por %p123, %p124
      %p126 = scmp.ne.s32.totalorder %s117, %s118
      %p127 = scmp.eq.s32.totalorder %s23, 0
      %p128 = por %p126, %p127
      %p129 = scmp.ne.s32.totalorder %s117, %s118
      %p130 = scmp.eq.s32.totalorder %s24, 1
      %p131 = por %p129, %p130
      %p133 = scmp.ne.s32.totalorder %s118, %s132
      %p134 = scmp.eq.s32.totalorder %s24, 0
      %p135 = por %p133, %p134
      %s137 = sadd.s32 %s136, 1
      %p140 = scmp.eq.s32.totalorder %s18, 1
      %p141 = scmp.ne.s32.totalorder %s136, %s138
      %p142 = scmp.eq.s32.totalorder %s18, 0
      %p143 = por %p141, %p142
      %p144 = scmp.ne.s32.totalorder %s136, %s138
      %p145 = scmp.eq.s32.totalorder %s23, 1
      %p146 = por %p144, %p145
      %p147 = scmp.ne.s32.totalorder %s138, %s139
      %p148 = scmp.eq.s32.totalorder %s23, 0
      %p149 = por %p147, %p148
      %p150 = scmp.ne.s32.totalorder %s138, %s139
      %p151 = scmp.eq.s32.totalorder %s24, 1
      %p152 = por %p150, %p151
      %p154 = scmp.ne.s32.totalorder %s139, %s153
      %p155 = scmp.eq.s32.totalorder %s24, 0
      %p156 = por %p154, %p155
      %s158 = sadd.s32 %s157, 1
      %p161 = scmp.eq.s32.totalorder %s18, 1
      %p162 = scmp.ne.s32.totalorder %s157, %s159
      %p163 = scmp.eq.s32.totalorder %s18, 0
      %p164 = por %p162, %p163
      %p165 = scmp.ne.s32.totalorder %s157, %s159
      %p166 = scmp.eq.s32.totalorder %s23, 1
      %p167 = por %p165, %p166
      %p168 = scmp.ne.s32.totalorder %s159, %s160
      %p169 = scmp.eq.s32.totalorder %s23, 0
      %p170 = por %p168, %p169
      %p171 = scmp.ne.s32.totalorder %s159, %s160
      %p172 = scmp.eq.s32.totalorder %s24, 1
      %p173 = por %p171, %p172
      %p175 = scmp.ne.s32.totalorder %s160, %s174
      %p176 = scmp.eq.s32.totalorder %s24, 0
      %p177 = por %p175, %p176
      %s179 = sadd.s32 %s178, 1
      %p182 = scmp.eq.s32.totalorder %s18, 1
      %p183 = scmp.ne.s32.totalorder %s178, %s180
      %p184 = scmp.eq.s32.totalorder %s18, 0
      %p185 = por %p183, %p184
      %p186 = scmp.ne.s32.totalorder %s178, %s180
      %p187 = scmp.eq.s32.totalorder %s23, 1
      %p188 = por %p186, %p187
      %p189 = scmp.ne.s32.totalorder %s180, %s181
      %p190 = scmp.eq.s32.totalorder %s23, 0
      %p191 = por %p189, %p190
      %p192 = scmp.ne.s32.totalorder %s180, %s181
      %p193 = scmp.eq.s32.totalorder %s24, 1
      %p194 = por %p192, %p193
      %p196 = scmp.ne.s32.totalorder %s181, %s195
      %p197 = scmp.eq.s32.totalorder %s24, 0
      %p198 = por %p196, %p197
      %s200 = sadd.s32 %s199, 1
      %p203 = scmp.eq.s32.totalorder %s18, 1
      %p204 = scmp.ne.s32.totalorder %s199, %s201
      %p205 = scmp.eq.s32.totalorder %s18, 0
      %p206 = por %p204, %p205
      %p207 = scmp.ne.s32.totalorder %s199, %s201
      %p208 = scmp.eq.s32.totalorder %s23, 1
      %p209 = por %p207, %p208
      %p210 = scmp.ne.s32.totalorder %s201, %s202
      %p211 = scmp.eq.s32.totalorder %s23, 0
      %p212 = por %p210, %p211
      %p213 = scmp.ne.s32.totalorder %s201, %s202
      %p214 = scmp.eq.s32.totalorder %s24, 1
      %p215 = por %p213, %p214
      %p217 = scmp.ne.s32.totalorder %s202, %s216
      %p218 = scmp.eq.s32.totalorder %s24, 0
      %p219 = por %p217, %p218
      %s220 = ssub.s32 %s18, %s25
      %p221 = scmp.eq.s32.totalorder %s220, 0
      %s223 = sadd.s32 %s222, 1
      %s224 = scalar_select %p221, %s222, %s223
      %p227 = pneg %p221
      %p228 = scmp.eq.s32.totalorder %s18, 1
      %p229 = por %p227, %p228
      %p230 = scmp.ne.s32.totalorder %s222, %s225
      %p231 = scmp.eq.s32.totalorder %s18, 0
      %p232 = por %p230, %p231
      %p233 = scmp.ne.s32.totalorder %s222, %s225
      %p234 = scmp.eq.s32.totalorder %s23, 1
      %p235 = por %p233, %p234
      %p236 = scmp.ne.s32.totalorder %s225, %s226
      %p237 = scmp.eq.s32.totalorder %s23, 0
      %p238 = por %p236, %p237
      %p239 = scmp.ne.s32.totalorder %s225, %s226
      %p240 = scmp.eq.s32.totalorder %s24, 1
      %p241 = por %p239, %p240
      %p243 = scmp.ne.s32.totalorder %s226, %s242
      %p244 = scmp.eq.s32.totalorder %s24, 0
      %p245 = por %p243, %p244
      %p246 = scmp.le.s32.totalorder 1, %s18
      %p247 = scmp.lt.s32.totalorder %s18, 3
      %p248 = pnand %p246, %p247
      %p249 = pneg %p248
      // Predicated region
      $region9: #{tpu_custom_call.1} parent=5 // pred_check
        _
      $region10: #{tpu_custom_call.1} parent=5 // pred_check_branch
        %251 = sbr.rel (%p248) target = $region12
      $region11: #{tpu_custom_call.1} parent=5 // pred_region
        %s252 = ssub.s32 %s18, 1
        // Predicated region
        $region13: #{tpu_custom_call.1} parent=11 // pred_check
          %p253 = pneg %p65
        $region14: #{tpu_custom_call.1} parent=11 // pred_check_branch
          %255 = sbr.rel (%p253) target = $region16
        $region15: #{tpu_custom_call.1} parent=11 // pred_region
          _
        $region16: #{tpu_custom_call.1} parent=11 // pred_fallthru
          _
        // Predicated region
        $region17: #{tpu_custom_call.1} parent=11 // pred_check
          %p256 = pneg %p86
        $region18: #{tpu_custom_call.1} parent=11 // pred_check_branch
          %258 = sbr.rel (%p256) target = $region20
        $region19: #{tpu_custom_call.1} parent=11 // pred_region
          _
        $region20: #{tpu_custom_call.1} parent=11 // pred_fallthru
          _
        // Predicated region
        $region21: #{tpu_custom_call.1} parent=11 // pred_check
          %p259 = pneg %p107
        $region22: #{tpu_custom_call.1} parent=11 // pred_check_branch
          %261 = sbr.rel (%p259) target = $region24
        $region23: #{tpu_custom_call.1} parent=11 // pred_region
          _
        $region24: #{tpu_custom_call.1} parent=11 // pred_fallthru
          _
        // Predicated region
        $region25: #{tpu_custom_call.1} parent=11 // pred_check
          %p262 = pneg %p128
        $region26: #{tpu_custom_call.1} parent=11 // pred_check_branch
          %264 = sbr.rel (%p262) target = $region28
        $region27: #{tpu_custom_call.1} parent=11 // pred_region
          _
        $region28: #{tpu_custom_call.1} parent=11 // pred_fallthru
          _
        // Predicated region
        $region29: #{tpu_custom_call.1} parent=11 // pred_check
          %p265 = pneg %p149
        $region30: #{tpu_custom_call.1} parent=11 // pred_check_branch
          %267 = sbr.rel (%p265) target = $region32
        $region31: #{tpu_custom_call.1} parent=11 // pred_region
          _
        $region32: #{tpu_custom_call.1} parent=11 // pred_fallthru
          _
        // Predicated region
        $region33: #{tpu_custom_call.1} parent=11 // pred_check
          %p268 = pneg %p170
        $region34: #{tpu_custom_call.1} parent=11 // pred_check_branch
          %270 = sbr.rel (%p268) target = $region36
        $region35: #{tpu_custom_call.1} parent=11 // pred_region
          _
        $region36: #{tpu_custom_call.1} parent=11 // pred_fallthru
          _
        // Predicated region
        $region37: #{tpu_custom_call.1} parent=11 // pred_check
          %p271 = pneg %p191
        $region38: #{tpu_custom_call.1} parent=11 // pred_check_branch
          %273 = sbr.rel (%p271) target = $region40
        $region39: #{tpu_custom_call.1} parent=11 // pred_region
          _
        $region40: #{tpu_custom_call.1} parent=11 // pred_fallthru
          _
        // Predicated region
        $region41: #{tpu_custom_call.1} parent=11 // pred_check
          %p274 = pneg %p212
        $region42: #{tpu_custom_call.1} parent=11 // pred_check_branch
          %276 = sbr.rel (%p274) target = $region44
        $region43: #{tpu_custom_call.1} parent=11 // pred_region
          _
        $region44: #{tpu_custom_call.1} parent=11 // pred_fallthru
          _
      $region12: #{tpu_custom_call.1} parent=5 // pred_fallthru
        _
      %p277 = scmp.lt.s32.totalorder %s18, 2
      // Predicated region
      $region45: #{tpu_custom_call.1} parent=5 // pred_check
        %p278 = pneg %p277
      $region46: #{tpu_custom_call.1} parent=5 // pred_check_branch
        %280 = sbr.rel (%p278) target = $region48
      $region47: #{tpu_custom_call.1} parent=5 // pred_region
        // Predicated region
        $region49: #{tpu_custom_call.1} parent=47 // pred_check
          %p281 = pneg %p38
        $region50: #{tpu_custom_call.1} parent=47 // pred_check_branch
          %283 = sbr.rel (%p281) target = $region52
        $region51: #{tpu_custom_call.1} parent=47 // pred_region
          %p284 = scmp.lt.s32.totalorder %s18, 1
          %s285 = scalar_select %p284, %s18, 1
          %s286 = smul.addr %s285, 2
          %s287 = smul.addr %s286, 4
          %s288 = scalar_lea.vmem %s0, %s287
        $region52: #{tpu_custom_call.1} parent=47 // pred_fallthru
          _
      $region48: #{tpu_custom_call.1} parent=5 // pred_fallthru
        _
      %p289 = scmp.le.s32.totalorder 1, %s18
      %p290 = scmp.lt.s32.totalorder %s18, 3
      %p291 = pnand %p289, %p290
      %p292 = pneg %p291
      // Predicated region
      $region53: #{tpu_custom_call.1} parent=5 // pred_check
        _
      $region54: #{tpu_custom_call.1} parent=5 // pred_check_branch
        %294 = sbr.rel (%p291) target = $region56
      $region55: #{tpu_custom_call.1} parent=5 // pred_region
        %s295 = ssub.s32 %s18, 1
        %p296 = scmp.lt.s32.totalorder %s23, 1
        %s297 = scalar_select %p296, %s23, 1
        %s298 = smul.addr %s297, 2
        %s299 = smul.addr %s298, 4
        %s300 = scalar_lea.vmem %s0, %s299
        %p301 = pneg %p44
        %p302 = pneg %p41
        %p303 = pneg %p65
        %p304 = pneg %p62
        %p305 = pneg %p86
        %p306 = pneg %p83
        %p307 = pneg %p107
        %p308 = pneg %p104
        %p309 = pneg %p128
        %p310 = pneg %p125
        %p311 = pneg %p149
        %p312 = pneg %p146
        %p313 = pneg %p170
        %p314 = pneg %p167
        %p315 = pneg %p191
        %p316 = pneg %p188
        %p317 = pneg %p212
        %p318 = pneg %p209
        %p319 = pneg %p238
        %p320 = pneg %p235
        %s321 = sand.u32 %s225, 1
        %s322 = scalar_lea.sflag [#allocation3], %s321
        %s323 = sand.u32 %s225, 1
        %s324 = smul.addr %s323, 8
        %s325 = scalar_lea.vmem [#allocation2], %s324
        %p326 = scmp.lt.s32.totalorder %s23, 1
        %s327 = scalar_select %p326, %s23, 1
        %s328 = smul.addr %s327, 2
        %s329 = smul.addr %s328, 4
        %s330 = scalar_lea.vmem %s0, %s329
        %v332 = vld [vmem:[%s330] sm:$0xff]
        %v333 = vld [vmem:[%s1] sm:$0xf]
        %v334 = vld [vmem:[%s1 + $0x4] sm:$0xf]
        %v335 = vld [vmem:[%s1 + $0x8] sm:$0xf]
        %v337 = vcombine.high %v332, %v332
        %v339 = vpack.c.bf16 %v332, %v332
        %v340 = vpack.c.bf16 %v337, %v337
        %v341 = vld [vmem:[%s2] sm:$0xff]
        %v342 = vld [vmem:[%s2 + $0x8] sm:$0xff]
        %v343 = vld [vmem:[%s2 + $0x10] sm:$0xff]
        %345 = vset.pattern.permute.xlu0 0
        %346 = vperm.xlu0 %345, %v341
        %v347 = vpop.permute.xlu0 %346
        %350 = vset.pattern.permute.xlu0 0
        %351 = vperm.xlu0 %350, %v342
        %v352 = vpop.permute.xlu0 %351
        %355 = vset.pattern.permute.xlu0 0
        %356 = vperm.xlu0 %355, %v343
        %v357 = vpop.permute.xlu0 %356
        %v362 = vunpack.c.l.b16 %v333
        %v363 = vunpack.c.l.b16 %v334
        %v364 = vunpack.c.l.b16 %v335
        %v365 = vpack.c.b16 %v363, %v362
        %v366 = vpack.c.b16 %v364, %v364
        %vm367 = vcmask 31744
        %v369 = vsel %vm367, %v365, 0
        %v372 = vsel %vm367, %v366, 0
        %vm374 = vcmask 1041408
        %v376 = vsel %vm374, %v339, 0
        %v379 = vsel %vm374, %v340, 0
        %381 = vmatprep.subr.bf16.mxu0 %v379
        %382 = vmatpush1.bf16.msra.mxu0 %v376
        %383 = vmatprep.subr.bf16.mxu0 0
        %384 = vmatpush1.bf16.msra.mxu0 0
        %385 = vmatprep.subr.bf16.mxu0 0
        %386 = vmatpush1.bf16.msra.mxu0 0
        %387 = vmatprep.subr.bf16.mxu0 0
        %388 = vmatpush1.bf16.msra.mxu0 0
        %389 = vmatprep.subr.bf16.mxu0 0
        %390 = vmatpush1.bf16.msra.mxu0 0
        %391 = vmatprep.subr.bf16.mxu0 0
        %392 = vmatpush1.bf16.msra.mxu0 0
        %393 = vmatprep.subr.bf16.mxu0 0
        %394 = vmatpush1.bf16.msra.mxu0 0
        %395 = vmatprep.subr.bf16.mxu0 0
        %396 = vmatpush1.bf16.msra.mxu0 0
        %397 = vmatprep.subr.bf16.mxu0 0
        %398 = vmatpush1.bf16.msra.mxu0 0
        %399 = vmatprep.subr.bf16.mxu0 0
        %400 = vmatpush1.bf16.msra.mxu0 0
        %401 = vmatprep.subr.bf16.mxu0 0
        %402 = vmatpush1.bf16.msra.mxu0 0
        %403 = vmatprep.subr.bf16.mxu0 0
        %404 = vmatpush1.bf16.msra.mxu0 0
        %405 = vmatprep.subr.bf16.mxu0 0
        %406 = vmatpush1.bf16.msra.mxu0 0
        %407 = vmatprep.subr.bf16.mxu0 0
        %408 = vmatpush1.bf16.msra.mxu0 0
        %409 = vmatprep.subr.bf16.mxu0 0
        %410 = vmatpush1.bf16.msra.mxu0 0
        %411 = vmatprep.subr.bf16.mxu0 0
        %412 = vmatpush1.bf16.msra.mxu0 0
        %413 = vmatprep.mubr.bf16.mxu0 0
        %414 = vmatmul.mubr.bf16.gmra.mrb[0].mxu0 %v369
        %v415 = vpop.f32.mrb[0].mxu0
        %v416 = vadd.f32 %v347, %v415
        %v417 = vpop.f32.mrb[0].mxu0
        %v418 = vadd.f32 %v347, %v417
        %v419 = vpop.f32.mrb[0].mxu0
        %v420 = vadd.f32 %v352, %v419
        %v421 = vpop.f32.mrb[0].mxu0
        %v422 = vadd.f32 %v352, %v421
        %423 = vmatprep.mubr.bf16.mxu0 0
        %424 = vmatmul.mubr.bf16.gmra.mrb[0].mxu0 %v372
        %v425 = vpop.f32.mrb[0].mxu0
        %v426 = vadd.f32 %v357, %v425
        %v427 = vpop.f32.mrb[0].mxu0
        %v428 = vadd.f32 %v357, %v427
        %v429 = vpop.f32.mrb[0].mxu0
        %v430 = vpop.f32.mrb[0].mxu0
        %431 = vdwg.mxu0
        %v432 = vmax.f32 %v416, 0.0
        %v433 = vmax.f32 %v418, 0.0
        %v434 = vmax.f32 %v420, 0.0
        %v435 = vmax.f32 %v422, 0.0
        %v436 = vmax.f32 %v426, 0.0
        %v437 = vmax.f32 %v428, 0.0
        %v438 = vld [vmem:[%s4] ss:$4 sm:$0x3]
        %s439 = scalar_lea.vmem %s4, 2
        %v440 = vld [vmem:[%s439] ss:$4 sm:$0x3]
        %447 = vrot.lane.b32.xlu0 %v432, 17
        %v448 = vpop.permute.xlu0 %447
        %449 = vrot.lane.b32.xlu0 %v433, 17
        %v450 = vpop.permute.xlu0 %449
        %451 = vrot.lane.b32.xlu0 %v434, 17
        %v452 = vpop.permute.xlu0 %451
        %453 = vrot.lane.b32.xlu0 %v435, 17
        %v454 = vpop.permute.xlu0 %453
        %455 = vrot.lane.b32.xlu0 %v436, 17
        %v456 = vpop.permute.xlu0 %455
        %457 = vrot.lane.b32.xlu0 %v437, 17
        %v458 = vpop.permute.xlu0 %457
        %vm459 = vcmask 138240
        %v460 = vsel %vm459, %v448, %v450
        %v461 = vsel %vm459, %v452, %v454
        %v462 = vsel %vm459, %v456, %v458
        %v472 = vsel %vm459, 0.0, %v448
        %v473 = vsel %vm459, 0.0, %v452
        %v474 = vsel %vm459, 0.0, %v456
        %v475 = vsel %vm459, %v450, 0.0
        %v476 = vsel %vm459, %v454, 0.0
        %v477 = vsel %vm459, %v458, 0.0
        %v479 = vlaneseq
        %v480 = vshrl.u32 %v479, 7
        %v481 = vsub.s32 0, %v480
        %v482 = vrot.slane %v438, %v481
        %v483 = vlaneseq
        %v484 = vshrl.u32 %v483, 7
        %v485 = vsub.s32 1, %v484
        %v486 = vrot.slane %v438, %v485
        %v489 = vmul.f32 %v472, %v482
        %v490 = vmul.f32 %v460, %v486
        %v491 = vmul.f32 %v473, %v482
        %v492 = vmul.f32 %v461, %v486
        %v493 = vmul.f32 %v474, %v482
        %v494 = vmul.f32 %v462, %v486
        %v495 = vld [vmem:[%s3] sm:$0xff]
        %v496 = vld [vmem:[%s3 + $0x8] sm:$0xff]
        %v497 = vld [vmem:[%s3 + $0x10] sm:$0xff]
        %499 = vset.pattern.permute.xlu0 0
        %500 = vperm.xlu0 %499, %v495
        %v501 = vpop.permute.xlu0 %500
        %504 = vset.pattern.permute.xlu0 0
        %505 = vperm.xlu0 %504, %v496
        %v506 = vpop.permute.xlu0 %505
        %509 = vset.pattern.permute.xlu0 0
        %510 = vperm.xlu0 %509, %v497
        %v511 = vpop.permute.xlu0 %510
        %v513 = vmul.f32 %v501, %v489
        %v514 = vmul.f32 %v501, %v490
        %v515 = vmul.f32 %v506, %v491
        %v516 = vmul.f32 %v506, %v492
        %v517 = vmul.f32 %v511, %v493
        %v518 = vmul.f32 %v511, %v494
        %v519 = vadd.f32 %v513, 0.0
        %v520 = vadd.f32 %v514, 0.0
        %v521 = vadd.f32 %v515, 0.0
        %v522 = vadd.f32 %v516, 0.0
        %v523 = vadd.f32 %v517, 0.0
        %v524 = vadd.f32 %v518, 0.0
        %525 = vset.pattern.permute.xlu0 1
        %526 = vperm.xlu0 %525, %v495
        %v527 = vpop.permute.xlu0 %526
        %529 = vset.pattern.permute.xlu0 1
        %530 = vperm.xlu0 %529, %v496
        %v531 = vpop.permute.xlu0 %530
        %533 = vset.pattern.permute.xlu0 1
        %534 = vperm.xlu0 %533, %v497
        %v535 = vpop.permute.xlu0 %534
        %v537 = vmul.f32 %v527, %v472
        %v538 = vmul.f32 %v527, %v460
        %v539 = vmul.f32 %v527, %v475
        %v540 = vmul.f32 %v531, %v473
        %v541 = vmul.f32 %v531, %v461
        %v542 = vmul.f32 %v531, %v476
        %v543 = vmul.f32 %v535, %v474
        %v544 = vmul.f32 %v535, %v462
        %v545 = vmul.f32 %v535, %v477
        %555 = vrot.lane.b32.xlu0 %v537, 127
        %v556 = vpop.permute.xlu0 %555
        %557 = vrot.lane.b32.xlu0 %v538, 127
        %v558 = vpop.permute.xlu0 %557
        %559 = vrot.lane.b32.xlu0 %v539, 127
        %v560 = vpop.permute.xlu0 %559
        %561 = vrot.lane.b32.xlu0 %v540, 127
        %v562 = vpop.permute.xlu0 %561
        %563 = vrot.lane.b32.xlu0 %v541, 127
        %v564 = vpop.permute.xlu0 %563
        %565 = vrot.lane.b32.xlu0 %v542, 127
        %v566 = vpop.permute.xlu0 %565
        %567 = vrot.lane.b32.xlu0 %v543, 127
        %v568 = vpop.permute.xlu0 %567
        %569 = vrot.lane.b32.xlu0 %v544, 127
        %v570 = vpop.permute.xlu0 %569
        %571 = vrot.lane.b32.xlu0 %v545, 127
        %v572 = vpop.permute.xlu0 %571
        %vm573 = vcmask 1039360
        %v574 = vsel %vm573, %v556, %v558
        %v575 = vsel %vm573, %v558, %v560
        %v576 = vsel %vm573, %v562, %v564
        %v577 = vsel %vm573, %v564, %v566
        %v578 = vsel %vm573, %v568, %v570
        %v579 = vsel %vm573, %v570, %v572
        %v586 = vadd.f32 %v519, %v574
        %v587 = vadd.f32 %v520, %v575
        %v588 = vadd.f32 %v521, %v576
        %v589 = vadd.f32 %v522, %v577
        %v590 = vadd.f32 %v523, %v578
        %v591 = vadd.f32 %v524, %v579
        %v593 = vlaneseq
        %v594 = vshrl.u32 %v593, 7
        %v595 = vsub.s32 0, %v594
        %v596 = vrot.slane %v440, %v595
        %v597 = vlaneseq
        %v598 = vshrl.u32 %v597, 7
        %v599 = vsub.s32 1, %v598
        %v600 = vrot.slane %v440, %v599
        %601 = vrot.lane.b32.xlu0 %v596, 2
        %v602 = vpop.permute.xlu0 %601
        %603 = vrot.lane.b32.xlu0 %v600, 2
        %v604 = vpop.permute.xlu0 %603
        %vm605 = vcmask 15360
        %v606 = vsel %vm605, %v602, %v604
        %v610 = vmul.f32 %v472, %v602
        %v611 = vmul.f32 %v460, %v606
        %v612 = vmul.f32 %v475, %v604
        %v613 = vmul.f32 %v473, %v602
        %v614 = vmul.f32 %v461, %v606
        %v615 = vmul.f32 %v476, %v604
        %v616 = vmul.f32 %v474, %v602
        %v617 = vmul.f32 %v462, %v606
        %v618 = vmul.f32 %v477, %v604
        %619 = vset.pattern.permute.xlu0 2
        %620 = vperm.xlu0 %619, %v495
        %v621 = vpop.permute.xlu0 %620
        %623 = vset.pattern.permute.xlu0 2
        %624 = vperm.xlu0 %623, %v496
        %v625 = vpop.permute.xlu0 %624
        %627 = vset.pattern.permute.xlu0 2
        %628 = vperm.xlu0 %627, %v497
        %v629 = vpop.permute.xlu0 %628
        %v631 = vmul.f32 %v621, %v610
        %v632 = vmul.f32 %v621, %v611
        %v633 = vmul.f32 %v621, %v612
        %v634 = vmul.f32 %v625, %v613
        %v635 = vmul.f32 %v625, %v614
        %v636 = vmul.f32 %v625, %v615
        %v637 = vmul.f32 %v629, %v616
        %v638 = vmul.f32 %v629, %v617
        %v639 = vmul.f32 %v629, %v618
        %649 = vrot.lane.b32.xlu0 %v631, 126
        %v650 = vpop.permute.xlu0 %649
        %651 = vrot.lane.b32.xlu0 %v632, 126
        %v652 = vpop.permute.xlu0 %651
        %653 = vrot.lane.b32.xlu0 %v633, 126
        %v654 = vpop.permute.xlu0 %653
        %655 = vrot.lane.b32.xlu0 %v634, 126
        %v656 = vpop.permute.xlu0 %655
        %657 = vrot.lane.b32.xlu0 %v635, 126
        %v658 = vpop.permute.xlu0 %657
        %659 = vrot.lane.b32.xlu0 %v636, 126
        %v660 = vpop.permute.xlu0 %659
        %661 = vrot.lane.b32.xlu0 %v637, 126
        %v662 = vpop.permute.xlu0 %661
        %663 = vrot.lane.b32.xlu0 %v638, 126
        %v664 = vpop.permute.xlu0 %663
        %665 = vrot.lane.b32.xlu0 %v639, 126
        %v666 = vpop.permute.xlu0 %665
        %vm667 = vcmask 1031168
        %v668 = vsel %vm667, %v650, %v652
        %v669 = vsel %vm667, %v652, %v654
        %v670 = vsel %vm667, %v656, %v658
        %v671 = vsel %vm667, %v658, %v660
        %v672 = vsel %vm667, %v662, %v664
        %v673 = vsel %vm667, %v664, %v666
        %v680 = vadd.f32 %v586, %v668
        %v681 = vadd.f32 %v587, %v669
        %v682 = vadd.f32 %v588, %v670
        %v683 = vadd.f32 %v589, %v671
        %v684 = vadd.f32 %v590, %v672
        %v685 = vadd.f32 %v591, %v673
        %686 = vrot.lane.b32.xlu0 %v482, 16
        %v687 = vpop.permute.xlu0 %686
        %688 = vrot.lane.b32.xlu0 %v486, 16
        %v689 = vpop.permute.xlu0 %688
        %vm690 = vcmask 130048
        %v691 = vsel %vm690, %v687, %v689
        %v695 = vmul.f32 %v472, %v687
        %v696 = vmul.f32 %v460, %v691
        %v697 = vmul.f32 %v475, %v689
        %v698 = vmul.f32 %v473, %v687
        %v699 = vmul.f32 %v461, %v691
        %v700 = vmul.f32 %v476, %v689
        %v701 = vmul.f32 %v474, %v687
        %v702 = vmul.f32 %v462, %v691
        %v703 = vmul.f32 %v477, %v689
        %704 = vset.pattern.permute.xlu0 3
        %705 = vperm.xlu0 %704, %v495
        %v706 = vpop.permute.xlu0 %705
        %708 = vset.pattern.permute.xlu0 3
        %709 = vperm.xlu0 %708, %v496
        %v710 = vpop.permute.xlu0 %709
        %712 = vset.pattern.permute.xlu0 3
        %713 = vperm.xlu0 %712, %v497
        %v714 = vpop.permute.xlu0 %713
        %v716 = vmul.f32 %v706, %v695
        %v717 = vmul.f32 %v706, %v696
        %v718 = vmul.f32 %v706, %v697
        %v719 = vmul.f32 %v710, %v698
        %v720 = vmul.f32 %v710, %v699
        %v721 = vmul.f32 %v710, %v700
        %v722 = vmul.f32 %v714, %v701
        %v723 = vmul.f32 %v714, %v702
        %v724 = vmul.f32 %v714, %v703
        %734 = vrot.lane.b32.xlu0 %v716, 112
        %v735 = vpop.permute.xlu0 %734
        %736 = vrot.lane.b32.xlu0 %v717, 112
        %v737 = vpop.permute.xlu0 %736
        %738 = vrot.lane.b32.xlu0 %v718, 112
        %v739 = vpop.permute.xlu0 %738
        %740 = vrot.lane.b32.xlu0 %v719, 112
        %v741 = vpop.permute.xlu0 %740
        %742 = vrot.lane.b32.xlu0 %v720, 112
        %v743 = vpop.permute.xlu0 %742
        %744 = vrot.lane.b32.xlu0 %v721, 112
        %v745 = vpop.permute.xlu0 %744
        %746 = vrot.lane.b32.xlu0 %v722, 112
        %v747 = vpop.permute.xlu0 %746
        %748 = vrot.lane.b32.xlu0 %v723, 112
        %v749 = vpop.permute.xlu0 %748
        %750 = vrot.lane.b32.xlu0 %v724, 112
        %v751 = vpop.permute.xlu0 %750
        %vm752 = vcmask 916480
        %v753 = vsel %vm752, %v735, %v737
        %v754 = vsel %vm752, %v737, %v739
        %v755 = vsel %vm752, %v741, %v743
        %v756 = vsel %vm752, %v743, %v745
        %v757 = vsel %vm752, %v747, %v749
        %v758 = vsel %vm752, %v749, %v751
        %v765 = vadd.f32 %v680, %v753
        %v766 = vadd.f32 %v681, %v754
        %v767 = vadd.f32 %v682, %v755
        %v768 = vadd.f32 %v683, %v756
        %v769 = vadd.f32 %v684, %v757
        %v770 = vadd.f32 %v685, %v758
        %771 = vset.pattern.permute.xlu0 4
        %772 = vperm.xlu0 %771, %v495
        %v773 = vpop.permute.xlu0 %772
        %775 = vset.pattern.permute.xlu0 4
        %776 = vperm.xlu0 %775, %v496
        %v777 = vpop.permute.xlu0 %776
        %779 = vset.pattern.permute.xlu0 4
        %780 = vperm.xlu0 %779, %v497
        %v781 = vpop.permute.xlu0 %780
        %v783 = vmul.f32 %v773, %v472
        %v784 = vmul.f32 %v773, %v460
        %v785 = vmul.f32 %v773, %v475
        %v786 = vmul.f32 %v777, %v473
        %v787 = vmul.f32 %v777, %v461
        %v788 = vmul.f32 %v777, %v476
        %v789 = vmul.f32 %v781, %v474
        %v790 = vmul.f32 %v781, %v462
        %v791 = vmul.f32 %v781, %v477
        %801 = vrot.lane.b32.xlu0 %v783, 111
        %v802 = vpop.permute.xlu0 %801
        %803 = vrot.lane.b32.xlu0 %v784, 111
        %v804 = vpop.permute.xlu0 %803
        %805 = vrot.lane.b32.xlu0 %v785, 111
        %v806 = vpop.permute.xlu0 %805
        %807 = vrot.lane.b32.xlu0 %v786, 111
        %v808 = vpop.permute.xlu0 %807
        %809 = vrot.lane.b32.xlu0 %v787, 111
        %v810 = vpop.permute.xlu0 %809
        %811 = vrot.lane.b32.xlu0 %v788, 111
        %v812 = vpop.permute.xlu0 %811
        %813 = vrot.lane.b32.xlu0 %v789, 111
        %v814 = vpop.permute.xlu0 %813
        %815 = vrot.lane.b32.xlu0 %v790, 111
        %v816 = vpop.permute.xlu0 %815
        %817 = vrot.lane.b32.xlu0 %v791, 111
        %v818 = vpop.permute.xlu0 %817
        %vm819 = vcmask 908288
        %v820 = vsel %vm819, %v802, %v804
        %v821 = vsel %vm819, %v804, %v806
        %v822 = vsel %vm819, %v808, %v810
        %v823 = vsel %vm819, %v810, %v812
        %v824 = vsel %vm819, %v814, %v816
        %v825 = vsel %vm819, %v816, %v818
        %v832 = vadd.f32 %v765, %v820
        %v833 = vadd.f32 %v766, %v821
        %v834 = vadd.f32 %v767, %v822
        %v835 = vadd.f32 %v768, %v823
        %v836 = vadd.f32 %v769, %v824
        %v837 = vadd.f32 %v770, %v825
        %838 = vrot.lane.b32.xlu0 %v596, 18
        %v839 = vpop.permute.xlu0 %838
        %840 = vrot.lane.b32.xlu0 %v600, 18
        %v841 = vpop.permute.xlu0 %840
        %vm842 = vcmask 146432
        %v843 = vsel %vm842, %v839, %v841
        %v847 = vmul.f32 %v472, %v839
        %v848 = vmul.f32 %v460, %v843
        %v849 = vmul.f32 %v475, %v841
        %v850 = vmul.f32 %v473, %v839
        %v851 = vmul.f32 %v461, %v843
        %v852 = vmul.f32 %v476, %v841
        %v853 = vmul.f32 %v474, %v839
        %v854 = vmul.f32 %v462, %v843
        %v855 = vmul.f32 %v477, %v841
        %856 = vset.pattern.permute.xlu0 5
        %857 = vperm.xlu0 %856, %v495
        %v858 = vpop.permute.xlu0 %857
        %860 = vset.pattern.permute.xlu0 5
        %861 = vperm.xlu0 %860, %v496
        %v862 = vpop.permute.xlu0 %861
        %864 = vset.pattern.permute.xlu0 5
        %865 = vperm.xlu0 %864, %v497
        %v866 = vpop.permute.xlu0 %865
        %v868 = vmul.f32 %v858, %v847
        %v869 = vmul.f32 %v858, %v848
        %v870 = vmul.f32 %v858, %v849
        %v871 = vmul.f32 %v862, %v850
        %v872 = vmul.f32 %v862, %v851
        %v873 = vmul.f32 %v862, %v852
        %v874 = vmul.f32 %v866, %v853
        %v875 = vmul.f32 %v866, %v854
        %v876 = vmul.f32 %v866, %v855
        %886 = vrot.lane.b32.xlu0 %v868, 110
        %v887 = vpop.permute.xlu0 %886
        %888 = vrot.lane.b32.xlu0 %v869, 110
        %v889 = vpop.permute.xlu0 %888
        %890 = vrot.lane.b32.xlu0 %v870, 110
        %v891 = vpop.permute.xlu0 %890
        %892 = vrot.lane.b32.xlu0 %v871, 110
        %v893 = vpop.permute.xlu0 %892
        %894 = vrot.lane.b32.xlu0 %v872, 110
        %v895 = vpop.permute.xlu0 %894
        %896 = vrot.lane.b32.xlu0 %v873, 110
        %v897 = vpop.permute.xlu0 %896
        %898 = vrot.lane.b32.xlu0 %v874, 110
        %v899 = vpop.permute.xlu0 %898
        %900 = vrot.lane.b32.xlu0 %v875, 110
        %v901 = vpop.permute.xlu0 %900
        %902 = vrot.lane.b32.xlu0 %v876, 110
        %v903 = vpop.permute.xlu0 %902
        %vm904 = vcmask 900096
        %v905 = vsel %vm904, %v887, %v889
        %v906 = vsel %vm904, %v889, %v891
        %v907 = vsel %vm904, %v893, %v895
        %v908 = vsel %vm904, %v895, %v897
        %v909 = vsel %vm904, %v899, %v901
        %v910 = vsel %vm904, %v901, %v903
        %v917 = vadd.f32 %v832, %v905
        %v918 = vadd.f32 %v833, %v906
        %v919 = vadd.f32 %v834, %v907
        %v920 = vadd.f32 %v835, %v908
        %v921 = vadd.f32 %v836, %v909
        %v922 = vadd.f32 %v837, %v910
        %923 = vrot.lane.b32.xlu0 %v482, 32
        %v924 = vpop.permute.xlu0 %923
        %925 = vrot.lane.b32.xlu0 %v486, 32
        %v926 = vpop.permute.xlu0 %925
        %vm927 = vcmask 261120
        %v928 = vsel %vm927, %v924, %v926
        %v932 = vmul.f32 %v472, %v924
        %v933 = vmul.f32 %v460, %v928
        %v934 = vmul.f32 %v475, %v926
        %v935 = vmul.f32 %v473, %v924
        %v936 = vmul.f32 %v461, %v928
        %v937 = vmul.f32 %v476, %v926
        %v938 = vmul.f32 %v474, %v924
        %v939 = vmul.f32 %v462, %v928
        %v940 = vmul.f32 %v477, %v926
        %941 = vset.pattern.permute.xlu0 6
        %942 = vperm.xlu0 %941, %v495
        %v943 = vpop.permute.xlu0 %942
        %945 = vset.pattern.permute.xlu0 6
        %946 = vperm.xlu0 %945, %v496
        %v947 = vpop.permute.xlu0 %946
        %949 = vset.pattern.permute.xlu0 6
        %950 = vperm.xlu0 %949, %v497
        %v951 = vpop.permute.xlu0 %950
        %v953 = vmul.f32 %v943, %v932
        %v954 = vmul.f32 %v943, %v933
        %v955 = vmul.f32 %v943, %v934
        %v956 = vmul.f32 %v947, %v935
        %v957 = vmul.f32 %v947, %v936
        %v958 = vmul.f32 %v947, %v937
        %v959 = vmul.f32 %v951, %v938
        %v960 = vmul.f32 %v951, %v939
        %v961 = vmul.f32 %v951, %v940
        %971 = vrot.lane.b32.xlu0 %v953, 96
        %v972 = vpop.permute.xlu0 %971
        %973 = vrot.lane.b32.xlu0 %v954, 96
        %v974 = vpop.permute.xlu0 %973
        %975 = vrot.lane.b32.xlu0 %v955, 96
        %v976 = vpop.permute.xlu0 %975
        %977 = vrot.lane.b32.xlu0 %v956, 96
        %v978 = vpop.permute.xlu0 %977
        %979 = vrot.lane.b32.xlu0 %v957, 96
        %v980 = vpop.permute.xlu0 %979
        %981 = vrot.lane.b32.xlu0 %v958, 96
        %v982 = vpop.permute.xlu0 %981
        %983 = vrot.lane.b32.xlu0 %v959, 96
        %v984 = vpop.permute.xlu0 %983
        %985 = vrot.lane.b32.xlu0 %v960, 96
        %v986 = vpop.permute.xlu0 %985
        %987 = vrot.lane.b32.xlu0 %v961, 96
        %v988 = vpop.permute.xlu0 %987
        %vm989 = vcmask 785408
        %v990 = vsel %vm989, %v972, %v974
        %v991 = vsel %vm989, %v974, %v976
        %v992 = vsel %vm989, %v978, %v980
        %v993 = vsel %vm989, %v980, %v982
        %v994 = vsel %vm989, %v984, %v986
        %v995 = vsel %vm989, %v986, %v988
        %v1002 = vadd.f32 %v917, %v990
        %v1003 = vadd.f32 %v918, %v991
        %v1004 = vadd.f32 %v919, %v992
        %v1005 = vadd.f32 %v920, %v993
        %v1006 = vadd.f32 %v921, %v994
        %v1007 = vadd.f32 %v922, %v995
        %1008 = vset.pattern.permute.xlu0 7
        %1009 = vperm.xlu0 %1008, %v495
        %v1010 = vpop.permute.xlu0 %1009
        %1012 = vset.pattern.permute.xlu0 7
        %1013 = vperm.xlu0 %1012, %v496
        %v1014 = vpop.permute.xlu0 %1013
        %1016 = vset.pattern.permute.xlu0 7
        %1017 = vperm.xlu0 %1016, %v497
        %v1018 = vpop.permute.xlu0 %1017
        %v1020 = vmul.f32 %v1010, %v472
        %v1021 = vmul.f32 %v1010, %v460
        %v1022 = vmul.f32 %v1010, %v475
        %v1023 = vmul.f32 %v1014, %v473
        %v1024 = vmul.f32 %v1014, %v461
        %v1025 = vmul.f32 %v1014, %v476
        %v1026 = vmul.f32 %v1018, %v474
        %v1027 = vmul.f32 %v1018, %v462
        %v1028 = vmul.f32 %v1018, %v477
        %1038 = vrot.lane.b32.xlu0 %v1020, 95
        %v1039 = vpop.permute.xlu0 %1038
        %1040 = vrot.lane.b32.xlu0 %v1021, 95
        %v1041 = vpop.permute.xlu0 %1040
        %1042 = vrot.lane.b32.xlu0 %v1022, 95
        %v1043 = vpop.permute.xlu0 %1042
        %1044 = vrot.lane.b32.xlu0 %v1023, 95
        %v1045 = vpop.permute.xlu0 %1044
        %1046 = vrot.lane.b32.xlu0 %v1024, 95
        %v1047 = vpop.permute.xlu0 %1046
        %1048 = vrot.lane.b32.xlu0 %v1025, 95
        %v1049 = vpop.permute.xlu0 %1048
        %1050 = vrot.lane.b32.xlu0 %v1026, 95
        %v1051 = vpop.permute.xlu0 %1050
        %1052 = vrot.lane.b32.xlu0 %v1027, 95
        %v1053 = vpop.permute.xlu0 %1052
        %1054 = vrot.lane.b32.xlu0 %v1028, 95
        %v1055 = vpop.permute.xlu0 %1054
        %vm1056 = vcmask 777216
        %v1057 = vsel %vm1056, %v1039, %v1041
        %v1058 = vsel %vm1056, %v1041, %v1043
        %v1059 = vsel %vm1056, %v1045, %v1047
        %v1060 = vsel %vm1056, %v1047, %v1049
        %v1061 = vsel %vm1056, %v1051, %v1053
        %v1062 = vsel %vm1056, %v1053, %v1055
        %v1069 = vadd.f32 %v1002, %v1057
        %v1070 = vadd.f32 %v1003, %v1058
        %v1071 = vadd.f32 %v1004, %v1059
        %v1072 = vadd.f32 %v1005, %v1060
        %v1073 = vadd.f32 %v1006, %v1061
        %v1074 = vadd.f32 %v1007, %v1062
        %1075 = vrot.lane.b32.xlu0 %v596, 34
        %v1076 = vpop.permute.xlu0 %1075
        %1077 = vrot.lane.b32.xlu0 %v600, 34
        %v1078 = vpop.permute.xlu0 %1077
        %vm1079 = vcmask 277504
        %v1080 = vsel %vm1079, %v1076, %v1078
        %v1084 = vmul.f32 %v472, %v1076
        %v1085 = vmul.f32 %v460, %v1080
        %v1086 = vmul.f32 %v475, %v1078
        %v1087 = vmul.f32 %v473, %v1076
        %v1088 = vmul.f32 %v461, %v1080
        %v1089 = vmul.f32 %v476, %v1078
        %v1090 = vmul.f32 %v474, %v1076
        %v1091 = vmul.f32 %v462, %v1080
        %v1092 = vmul.f32 %v477, %v1078
        %1093 = vset.pattern.permute.xlu0 8
        %1094 = vperm.xlu0 %1093, %v495
        %v1095 = vpop.permute.xlu0 %1094
        %1097 = vset.pattern.permute.xlu0 8
        %1098 = vperm.xlu0 %1097, %v496
        %v1099 = vpop.permute.xlu0 %1098
        %1101 = vset.pattern.permute.xlu0 8
        %1102 = vperm.xlu0 %1101, %v497
        %v1103 = vpop.permute.xlu0 %1102
        %v1105 = vmul.f32 %v1095, %v1084
        %v1106 = vmul.f32 %v1095, %v1085
        %v1107 = vmul.f32 %v1095, %v1086
        %v1108 = vmul.f32 %v1099, %v1087
        %v1109 = vmul.f32 %v1099, %v1088
        %v1110 = vmul.f32 %v1099, %v1089
        %v1111 = vmul.f32 %v1103, %v1090
        %v1112 = vmul.f32 %v1103, %v1091
        %v1113 = vmul.f32 %v1103, %v1092
        %1123 = vrot.lane.b32.xlu0 %v1105, 94
        %v1124 = vpop.permute.xlu0 %1123
        %1125 = vrot.lane.b32.xlu0 %v1106, 94
        %v1126 = vpop.permute.xlu0 %1125
        %1127 = vrot.lane.b32.xlu0 %v1107, 94
        %v1128 = vpop.permute.xlu0 %1127
        %1129 = vrot.lane.b32.xlu0 %v1108, 94
        %v1130 = vpop.permute.xlu0 %1129
        %1131 = vrot.lane.b32.xlu0 %v1109, 94
        %v1132 = vpop.permute.xlu0 %1131
        %1133 = vrot.lane.b32.xlu0 %v1110, 94
        %v1134 = vpop.permute.xlu0 %1133
        %1135 = vrot.lane.b32.xlu0 %v1111, 94
        %v1136 = vpop.permute.xlu0 %1135
        %1137 = vrot.lane.b32.xlu0 %v1112, 94
        %v1138 = vpop.permute.xlu0 %1137
        %1139 = vrot.lane.b32.xlu0 %v1113, 94
        %v1140 = vpop.permute.xlu0 %1139
        %vm1141 = vcmask 769024
        %v1142 = vsel %vm1141, %v1124, %v1126
        %v1143 = vsel %vm1141, %v1126, %v1128
        %v1144 = vsel %vm1141, %v1130, %v1132
        %v1145 = vsel %vm1141, %v1132, %v1134
        %v1146 = vsel %vm1141, %v1136, %v1138
        %v1147 = vsel %vm1141, %v1138, %v1140
        %v1154 = vadd.f32 %v1069, %v1142
        %v1155 = vadd.f32 %v1070, %v1143
        %v1156 = vadd.f32 %v1071, %v1144
        %v1157 = vadd.f32 %v1072, %v1145
        %v1158 = vadd.f32 %v1073, %v1146
        %v1159 = vadd.f32 %v1074, %v1147
        %v1160 = vld [vmem:[%s6] sm:$0xff]
        %v1161 = vld [vmem:[%s6 + $0x8] sm:$0xff]
        %v1162 = vld [vmem:[%s6 + $0x10] sm:$0xff]
        %v1163 = vld [vmem:[%s6 + $0x18] sm:$0xff]
        %v1164 = vld [vmem:[%s6 + $0x20] sm:$0xff]
        %v1165 = vld [vmem:[%s6 + $0x28] sm:$0xff]
        %v1166 = vld [vmem:[%s6 + $0x30] sm:$0xff]
        %v1167 = vld [vmem:[%s6 + $0x38] sm:$0xff]
        %v1168 = vld [vmem:[%s6 + $0x40] sm:$0xff]
        %v1169 = vld [vmem:[%s6 + $0x48] sm:$0xff]
        %v1170 = vld [vmem:[%s6 + $0x50] sm:$0xff]
        %v1171 = vld [vmem:[%s6 + $0x58] sm:$0xff]
        %v1172 = vld [vmem:[%s6 + $0x60] sm:$0xff]
        %v1173 = vld [vmem:[%s6 + $0x68] sm:$0xff]
        %v1174 = vld [vmem:[%s6 + $0x70] sm:$0xff]
        %v1175 = vld [vmem:[%s6 + $0x78] sm:$0xff]
        %v1176 = vld [vmem:[%s6 + $0x80] sm:$0xff]
        %v1177 = vld [vmem:[%s6 + $0x88] sm:$0xff]
        %v1178 = vld [vmem:[%s6 + $0x90] sm:$0xff]
        %v1179 = vld [vmem:[%s6 + $0x98] sm:$0xff]
        %v1180 = vld [vmem:[%s6 + $0xa0] sm:$0xff]
        %v1181 = vld [vmem:[%s6 + $0xa8] sm:$0xff]
        %v1182 = vld [vmem:[%s6 + $0xb0] sm:$0xff]
        %v1183 = vld [vmem:[%s6 + $0xb8] sm:$0xff]
        %v1184 = vld [vmem:[%s6 + $0xc0] sm:$0xff]
        %v1185 = vld [vmem:[%s6 + $0xc8] sm:$0xff]
        %v1186 = vld [vmem:[%s6 + $0xd0] sm:$0xff]
        %v1187 = vld [vmem:[%s6 + $0xd8] sm:$0xff]
        %v1188 = vld [vmem:[%s6 + $0xe0] sm:$0xff]
        %v1189 = vld [vmem:[%s6 + $0xe8] sm:$0xff]
        %v1190 = vld [vmem:[%s6 + $0xf0] sm:$0xff]
        %v1191 = vld [vmem:[%s6 + $0xf8] sm:$0xff]
        %v1192 = vld [vmem:[%s5] sm:$0xff]
        %v1193 = vld [vmem:[%s5 + $0x8] sm:$0xff]
        %v1194 = vld [vmem:[%s5 + $0x10] sm:$0xff]
        %1196 = vset.pattern.permute.xlu0 0
        %1197 = vperm.xlu0 %1196, %v1192
        %v1198 = vpop.permute.xlu0 %1197
        %1201 = vset.pattern.permute.xlu0 0
        %1202 = vperm.xlu0 %1201, %v1193
        %v1203 = vpop.permute.xlu0 %1202
        %1206 = vset.pattern.permute.xlu0 0
        %1207 = vperm.xlu0 %1206, %v1194
        %v1208 = vpop.permute.xlu0 %1207
        %1210 = vmatprep.subr.mxu0 0.0
        %1211 = vmatpush1.msra.mxu0 %v1160
        %1212 = vmatprep.subr.mxu0 0.0
        %1213 = vmatpush1.msra.mxu0 %v1161
        %1214 = vmatprep.subr.mxu0 0.0
        %1215 = vmatpush1.msra.mxu0 %v1162
        %1216 = vmatprep.subr.mxu0 0.0
        %1217 = vmatpush1.msra.mxu0 %v1163
        %1218 = vmatprep.subr.mxu0 0.0
        %1219 = vmatpush1.msra.mxu0 %v1164
        %1220 = vmatprep.subr.mxu0 0.0
        %1221 = vmatpush1.msra.mxu0 %v1165
        %1222 = vmatprep.subr.mxu0 0.0
        %1223 = vmatpush1.msra.mxu0 %v1166
        %1224 = vmatprep.subr.mxu0 0.0
        %1225 = vmatpush1.msra.mxu0 %v1167
        %1226 = vmatprep.subr.mxu0 0.0
        %1227 = vmatpush1.msra.mxu0 %v1168
        %1228 = vmatprep.subr.mxu0 0.0
        %1229 = vmatpush1.msra.mxu0 %v1169
        %1230 = vmatprep.subr.mxu0 0.0
        %1231 = vmatpush1.msra.mxu0 %v1170
        %1232 = vmatprep.subr.mxu0 0.0
        %1233 = vmatpush1.msra.mxu0 %v1171
        %1234 = vmatprep.subr.mxu0 0.0
        %1235 = vmatpush1.msra.mxu0 %v1172
        %1236 = vmatprep.subr.mxu0 0.0
        %1237 = vmatpush1.msra.mxu0 %v1173
        %1238 = vmatprep.subr.mxu0 0.0
        %1239 = vmatpush1.msra.mxu0 %v1174
        %1240 = vmatprep.subr.mxu0 0.0
        %1241 = vmatpush1.msra.mxu0 %v1175
        %1242 = vmatprep.subr.mxu0 0.0
        %1243 = vmatpush1.msra.mxu0 %v1176
        %1244 = vmatprep.subr.mxu0 0.0
        %1245 = vmatpush1.msra.mxu0 %v1177
        %1246 = vmatprep.subr.mxu0 0.0
        %1247 = vmatpush1.msra.mxu0 %v1178
        %1248 = vmatprep.subr.mxu0 0.0
        %1249 = vmatpush1.msra.mxu0 %v1179
        %1250 = vmatprep.subr.mxu0 0.0
        %1251 = vmatpush1.msra.mxu0 %v1180
        %1252 = vmatprep.subr.mxu0 0.0
        %1253 = vmatpush1.msra.mxu0 %v1181
        %1254 = vmatprep.subr.mxu0 0.0
        %1255 = vmatpush1.msra.mxu0 %v1182
        %1256 = vmatprep.subr.mxu0 0.0
        %1257 = vmatpush1.msra.mxu0 %v1183
        %1258 = vmatprep.subr.mxu0 0.0
        %1259 = vmatpush1.msra.mxu0 %v1184
        %1260 = vmatprep.subr.mxu0 0.0
        %1261 = vmatpush1.msra.mxu0 %v1185
        %1262 = vmatprep.subr.mxu0 0.0
        %1263 = vmatpush1.msra.mxu0 %v1186
        %1264 = vmatprep.subr.mxu0 0.0
        %1265 = vmatpush1.msra.mxu0 %v1187
        %1266 = vmatprep.subr.mxu0 0.0
        %1267 = vmatpush1.msra.mxu0 %v1188
        %1268 = vmatprep.subr.mxu0 0.0
        %1269 = vmatpush1.msra.mxu0 %v1189
        %1270 = vmatprep.subr.mxu0 0.0
        %1271 = vmatpush1.msra.mxu0 %v1190
        %1272 = vmatprep.subr.mxu0 0.0
        %1273 = vmatpush1.msra.mxu0 %v1191
        %1274 = vmatprep.mubr.f32.mxu0 %v1155
        %1275 = vmatmul.mubr.f32.gmra.mrb[0].mxu0 %v1154
        %v1276 = vpop.f32.mrb[0].mxu0
        %v1277 = vadd.f32 %v1198, %v1276
        %v1278 = vpop.f32.mrb[0].mxu0
        %1279 = vmatprep.mubr.f32.mxu0 %v1157
        %1280 = vmatmul.mubr.f32.gmra.mrb[0].mxu0 %v1156
        %v1281 = vpop.f32.mrb[0].mxu0
        %v1282 = vadd.f32 %v1203, %v1281
        %v1283 = vpop.f32.mrb[0].mxu0
        %1284 = vmatprep.mubr.f32.mxu0 %v1159
        %1285 = vmatmul.mubr.f32.gmra.mrb[0].mxu0 %v1158
        %v1286 = vpop.f32.mrb[0].mxu0
        %v1287 = vadd.f32 %v1208, %v1286
        %v1288 = vpop.f32.mrb[0].mxu0
        %1289 = vdwg.mxu0
        %v1290 = vmax.f32 %v1277, 0.0
        %v1291 = vmax.f32 %v1282, 0.0
        %v1292 = vmax.f32 %v1287, 0.0
        %v1293 = vld [vmem:[%s7] sm:$0xf]
        %v1294 = vpack.c.bf16 %v1291, %v1290
        %v1295 = vpack.c.bf16 %v1292, %v1292
        %v1296 = vld [vmem:[%s8] sm:$0xff]
        %1298 = vset.pattern.permute.xlu0 0
        %1299 = vperm.xlu0 %1298, %v1296
        %v1300 = vpop.permute.xlu0 %1299
        %vm1302 = vcmask 195584
        %v1304 = vsel %vm1302, %v1293, 0
        %vm1306 = vcmask 1043456
        %v1308 = vsel %vm1306, %v1295, 0
        %1310 = vmatprep.subr.bf16.mxu0 0
        %1311 = vmatpush1.bf16.msra.mxu0 %v1294
        %1312 = vmatprep.subr.bf16.mxu0 0
        %1313 = vmatpush1.bf16.msra.mxu0 %v1308
        %1314 = vmatprep.subr.bf16.mxu0 0
        %1315 = vmatpush1.bf16.msra.mxu0 0
        %1316 = vmatprep.subr.bf16.mxu0 0
        %1317 = vmatpush1.bf16.msra.mxu0 0
        %1318 = vmatprep.subr.bf16.mxu0 0
        %1319 = vmatpush1.bf16.msra.mxu0 0
        %1320 = vmatprep.subr.bf16.mxu0 0
        %1321 = vmatpush1.bf16.msra.mxu0 0
        %1322 = vmatprep.subr.bf16.mxu0 0
        %1323 = vmatpush1.bf16.msra.mxu0 0
        %1324 = vmatprep.subr.bf16.mxu0 0
        %1325 = vmatpush1.bf16.msra.mxu0 0
        %1326 = vmatprep.subr.bf16.mxu0 0
        %1327 = vmatpush1.bf16.msra.mxu0 0
        %1328 = vmatprep.subr.bf16.mxu0 0
        %1329 = vmatpush1.bf16.msra.mxu0 0
        %1330 = vmatprep.subr.bf16.mxu0 0
        %1331 = vmatpush1.bf16.msra.mxu0 0
        %1332 = vmatprep.subr.bf16.mxu0 0
        %1333 = vmatpush1.bf16.msra.mxu0 0
        %1334 = vmatprep.subr.bf16.mxu0 0
        %1335 = vmatpush1.bf16.msra.mxu0 0
        %1336 = vmatprep.subr.bf16.mxu0 0
        %1337 = vmatpush1.bf16.msra.mxu0 0
        %1338 = vmatprep.subr.bf16.mxu0 0
        %1339 = vmatpush1.bf16.msra.mxu0 0
        %1340 = vmatprep.subr.bf16.mxu0 0
        %1341 = vmatpush1.bf16.msra.mxu0 0
        %1342 = vmatprep.mubr.bf16.mxu0 0
        %1343 = vmatmul.mubr.bf16.gmra.mrb[0].mxu0 %v1304
        %v1344 = vpop.f32.mrb[0].mxu0
        %v1345 = vadd.f32 %v1300, %v1344
        %v1346 = vpop.f32.mrb[0].mxu0
        %v1347 = vpop.f32.mrb[0].mxu0
        %v1348 = vpop.f32.mrb[0].mxu0
        %1349 = vdwg.mxu0
        %vm1350 = vcmask 523264
        %1351 = vst.msk [vmem:[%s325] sm:$0xff] %vm1350, %v1345
        %s1352 = sand.u32 %s225, 1
        %s1353 = scalar_lea.sflag [#allocation3], %s1352
        %s1354 = sand.u32 %s225, 1
        %s1355 = smul.addr %s1354, 8
        %s1356 = scalar_lea.vmem [#allocation2], %s1355
        // Predicated region
        $region57: #{tpu_custom_call.1} parent=55 // pred_check
          %p1357 = pneg %p235
        $region58: #{tpu_custom_call.1} parent=55 // pred_check_branch
          %1359 = sbr.rel (%p1357) target = $region60
        $region59: #{tpu_custom_call.1} parent=55 // pred_region
          %s1361 = ssub.s32 128, 128
          %1362 = vsyncadd %s1353, %s1361
          %s1363 = smul.addr %s23, 128
          %s1364 = scalar_lea.hbm %s9, %s1363
          %s1366 = sshll.u32 %s1356, 4
          %s1367 = int_to_ptr.vmem [resolvable:$true] %s1366
          %1369 = dma.vmem_to_hbm [thread:$0]  %s1367, 128, %s1364, %s1353
        $region60: #{tpu_custom_call.1} parent=55 // pred_fallthru
          _
      $region56: #{tpu_custom_call.1} parent=5 // pred_fallthru
        _
      %p1370 = scmp.le.s32.totalorder 2, %s18
      // Predicated region
      $region61: #{tpu_custom_call.1} parent=5 // pred_check
        %p1371 = pneg %p1370
      $region62: #{tpu_custom_call.1} parent=5 // pred_check_branch
        %1373 = sbr.rel (%p1371) target = $region64
      $region63: #{tpu_custom_call.1} parent=5 // pred_region
        %s1374 = ssub.s32 %s18, 2
        // Predicated region
        $region65: #{tpu_custom_call.1} parent=63 // pred_check
          %p1375 = pneg %p241
        $region66: #{tpu_custom_call.1} parent=63 // pred_check_branch
          %1377 = sbr.rel (%p1375) target = $region68
        $region67: #{tpu_custom_call.1} parent=63 // pred_region
          %s1378 = sand.u32 %s226, 1
          %s1379 = scalar_lea.sflag [#allocation3], %s1378
          %s1380 = sand.u32 %s226, 1
          %s1381 = smul.addr %s1380, 8
          %s1382 = scalar_lea.vmem [#allocation2], %s1381
          %1383 = dma.done %s1379, 128
        $region68: #{tpu_custom_call.1} parent=63 // pred_fallthru
          _
      $region64: #{tpu_custom_call.1} parent=5 // pred_fallthru
        _
    $region6: #{tpu_custom_call.1} parent=1 // loop_footer
      %s22 = sadd.s32 1, %s18
    $region7: #{tpu_custom_call.1} parent=1 // loop_footer_branch
      %17 = sbr.rel target = $region3
    $region8: #{tpu_custom_call.1} parent=1 // loop_exit
      _
    %1384 = vsyncpa [#allocation3], 1
    %s1385 = scalar_lea.sflag [#allocation3], 1
    %1386 = vsyncpa %s1385, 1

</llo_original>
